<compile_context>
chip_gen: v5e
topology: v5e:2x2
jax: 0.10.0
libtpu: 0.0.40
codegen_flags: <defaults>
</compile_context>

<pallas_src>
import math
import functools

import numpy as np
import jax
import jax.numpy as jnp
from jax.experimental import pallas as pl
from jax.experimental.pallas import tpu as pltpu


def _gelu_exact(x):
    # matches torch.nn.GELU() default (erf-based)
    return 0.5 * x * (1.0 + jax.lax.erf(x * (1.0 / math.sqrt(2.0))))


def _vmem_limit_bytes():
    # Computed at trace time (not import time) so AOT / mixed-generation fleets
    # see the right chip: 3/4 of physical VMEM = 96 MiB on v5e/v6e, 48 MiB on v7x.
    try:
        return int(3 * pltpu.get_tpu_info().vmem_capacity_bytes // 4)
    except Exception:
        return None


def _pick_oc_tile(OC, groups):
    # Output channels per grid step: multiple of the GroupNorm group size and of
    # 8 (sublane tile), dividing OC, capped near 128 so f32 temporaries / output
    # buffers stay small (v7x VMEM) without starving the MXU's M dimension.
    cpg = OC // groups
    step = cpg * 8 // math.gcd(cpg, 8)          # lcm(cpg, 8)
    cands = [d for d in range(step, OC + 1, step) if OC % d == 0]
    if not cands:
        return OC
    small = [d for d in cands if d <= 128]
    return max(small) if small else min(cands)


# ---------------------------------------------------------------------------
# Fused kernel: 3x3 conv (9 shifted dots) + GroupNorm + FiLM + GELU
#   grid = (batch, channel-group tile); all tensors channel-first, HW on lanes.
# ---------------------------------------------------------------------------
def make_upblock_kernel(oc_tile, C, H2, W2, pad, groups_per_tile, cpg, eps):
    HW = H2 * W2
    inv_n = 1.0 / float(cpg * HW)

    def kernel(xc_hbm, w_ref, cmask_ref, b_ref, mult_ref, add_ref, o_ref,
               img_ref, dma_sem):
        b = pl.program_id(0)

        # --- stage this batch's activations once (first channel-tile step) ---
        # The halo scratch persists across grid steps; only the two pad-wide
        # halo strips are zeroed (the DMA fully overwrites the center every
        # batch).  Done per batch, not only on the very first grid step, so it
        # stays correct when the batch axis is split across TensorCores.
        @pl.when(pl.program_id(1) == 0)
        def _():
            img_ref[:, pl.ds(0, pad)] = jnp.zeros((C, pad), img_ref.dtype)
            img_ref[:, pl.ds(pad + HW, pad)] = jnp.zeros((C, pad), img_ref.dtype)
            cp = pltpu.make_async_copy(
                xc_hbm.at[b], img_ref.at[:, pl.ds(pad, HW)], dma_sem)
            cp.start()
            cp.wait()
            # TODO(synk): double-buffer the halo scratch and prefetch the next
            # batch's activations so this DMA hides behind compute.

        # --- 3x3 conv == 9 accumulated (oc_tile,C)@(C,HW) MXU dots ---
        acc = jnp.zeros((oc_tile, HW), jnp.float32)
        t = 0
        for dy in (-1, 0, 1):
            for dx in (-1, 0, 1):
                off = dy * W2 + dx
                sh = img_ref[:, pl.ds(pad + off, HW)]            # (C, HW) bf16
                if dx != 0:
                    # zero lanes that wrapped across an image row (cols);
                    # row overflow is already zero thanks to the halo.
                    sh = sh * cmask_ref[0 if dx < 0 else 1]
                acc = acc + jnp.dot(w_ref[t], sh,
                                    preferred_element_type=jnp.float32)
                t += 1
        # TODO(synk): on v5e/v6e fuse the 3 dy taps per dx into one K=3C dot and
        # precompute left/right column-masked copies once HW tiling bounds the
        # staged-buffer size (MRF drain / small-K / VPU-mask savings).
        y = acc + b_ref[...]                                     # (oc_tile, HW) f32

        # --- GroupNorm: single-pass stats; groups are tile-local ---
        s1 = jnp.sum(y, axis=1, keepdims=True)                   # (oc_tile, 1)
        s2 = jnp.sum(y * y, axis=1, keepdims=True)               # (oc_tile, 1)
        ch = jax.lax.broadcasted_iota(jnp.int32, (oc_tile, 1), 0)
        mean_c = jnp.zeros((oc_tile, 1), jnp.float32)
        var_c = jnp.zeros((oc_tile, 1), jnp.float32)
        for g in range(groups_per_tile):
            in_g = jnp.logical_and(ch >= g * cpg, ch < (g + 1) * cpg)
            gs1 = jnp.sum(jnp.where(in_g, s1, 0.0), axis=0, keepdims=True)
            gs2 = jnp.sum(jnp.where(in_g, s2, 0.0), axis=0, keepdims=True)
            gmean = gs1 * inv_n
            gvar = jnp.maximum(gs2 * inv_n - gmean * gmean, 0.0)
            mean_c = jnp.where(in_g, gmean, mean_c)
            var_c = jnp.where(in_g, gvar, var_c)
        inv_c = jax.lax.rsqrt(var_c + eps)

        # --- folded GN affine + FiLM (mean folded into add), exact GELU ---
        m = inv_c * mult_ref[...]                                # (oc_tile, 1)
        a = add_ref[...] - mean_c * m                            # (oc_tile, 1)
        o_ref[...] = _gelu_exact(y * m + a).astype(o_ref.dtype)  # bf16 store

    return kernel


# ---------------------------------------------------------------------------
# Wrapper
# ---------------------------------------------------------------------------
@functools.partial(jax.jit, static_argnames=("groups", "eps", "oc_tile"))
def upblock_forward(x, skip, t_emb, params, *, groups=8, eps=1e-5, oc_tile=None):
    B, Cin, H, W = x.shape
    OC = skip.shape[1]
    H2, W2 = 2 * H, 2 * W
    HW = H2 * W2
    C = Cin + OC
    assert OC % groups == 0 and OC % 8 == 0
    cpg = OC // groups
    if oc_tile is None:
        oc_tile = _pick_oc_tile(OC, groups)
    assert OC % oc_tile == 0 and oc_tile % cpg == 0 and oc_tile % 8 == 0
    n_ct = OC // oc_tile

    # 2x nearest upsample + channel concat + flatten + bf16 cast (one fused XLA
    # pass over x/skip; no NCHW<->NHWC transposes anywhere).
    xu = jnp.repeat(jnp.repeat(x, 2, axis=2), 2, axis=3)
    xc = (jnp.concatenate([xu, skip], axis=1)
          .reshape(B, C, HW).astype(jnp.bfloat16))
    # TODO(synk): fold the nearest upsample of x into the kernel's staging DMA
    # to remove this extra HBM pass over the x-channels.

    # conv weight (OC, C, 3, 3) -> per-tap (9, OC, C) in (ky, kx) order.
    w_taps = (jnp.transpose(params["w_conv"], (2, 3, 0, 1))
              .reshape(9, OC, C).astype(jnp.bfloat16))
    bias = params["b_conv"].astype(jnp.float32).reshape(OC, 1)

    # Tiny time-embedding Linear+GELU stays in XLA; fold FiLM + GN affine into
    # one per-(batch, channel) multiplier/adder (f32).
    te = jax.nn.gelu(t_emb @ params["w_t"].T + params["b_t"], approximate=False)
    scale, shift = te[:, :OC], te[:, OC:]
    mult = (params["gn_w"][None, :] * (scale + 1.0)).reshape(B, OC, 1).astype(jnp.float32)
    add = (params["gn_b"][None, :] * (scale + 1.0) + shift).reshape(B, OC, 1).astype(jnp.float32)

    # Column-wrap masks for the dx = -1 / +1 taps (static -> baked constants).
    jj = np.arange(HW) % W2
    cmask_np = np.stack([(jj >= 1), (jj <= W2 - 2)]).astype(np.float32)
    cmask = jnp.asarray(cmask_np.reshape(2, 1, HW), dtype=jnp.bfloat16)

    pad = ((W2 + 1 + 127) // 128) * 128                     # lane-aligned halo
    kernel = make_upblock_kernel(oc_tile, C, H2, W2, pad,
                                 oc_tile // cpg, cpg, float(eps))

    compiler_kwargs = dict(dimension_semantics=("parallel", "arbitrary"))
    vmem_limit = _vmem_limit_bytes()
    if vmem_limit is not None:
        compiler_kwargs["vmem_limit_bytes"] = vmem_limit

    out = pl.pallas_call(
        kernel,
        out_shape=jax.ShapeDtypeStruct((B, OC, HW), jnp.bfloat16),
        grid_spec=pltpu.PrefetchScalarGridSpec(
            num_scalar_prefetch=0,
            grid=(B, n_ct),
            in_specs=[
                pl.BlockSpec(memory_space=pl.ANY),                         # activations (HBM, manual DMA)
                pl.BlockSpec((9, oc_tile, C), lambda b, ct: (0, ct, 0)),   # conv taps (per channel tile)
                pl.BlockSpec((2, 1, HW), lambda b, ct: (0, 0, 0)),         # column masks (resident)
                pl.BlockSpec((oc_tile, 1), lambda b, ct: (ct, 0)),         # conv bias
                pl.BlockSpec((None, oc_tile, 1), lambda b, ct: (b, ct, 0)),  # fused scale
                pl.BlockSpec((None, oc_tile, 1), lambda b, ct: (b, ct, 0)),  # fused shift
            ],
            out_specs=pl.BlockSpec((None, oc_tile, HW), lambda b, ct: (b, ct, 0)),
            scratch_shapes=[
                pltpu.VMEM((C, 2 * pad + HW), jnp.bfloat16),   # zero-halo image (persists)
                pltpu.SemaphoreType.DMA,                       # staging-DMA semaphore
            ],
        ),
        compiler_params=pltpu.CompilerParams(**compiler_kwargs),
    )(xc, w_taps, cmask, bias, mult, add)
    # TODO(synk): for large H*W add an HW-tile grid axis (halo rows fetched by
    # the staging DMA) so blocks fit v7x's 64 MiB VMEM and the pipeline gets
    # many more steps.

    # (B, OC, HW) is already channel-first: NCHW output is a free reshape.
    return out.reshape(B, OC, H2, W2)


# ---------------------------------------------------------------------------
# Pure-JAX reference (mirrors the PyTorch forward exactly, all f32)
# ---------------------------------------------------------------------------
def upblock_reference(x, skip, t_emb, params, *, groups=8, eps=1e-5):
    OC = skip.shape[1]
    xu = jnp.repeat(jnp.repeat(x, 2, axis=2), 2, axis=3)
    xc = jnp.concatenate([xu, skip], axis=1)
    h = jax.lax.conv_general_dilated(
        xc, params["w_conv"], (1, 1), [(1, 1), (1, 1)],
        dimension_numbers=("NCHW", "OIHW", "NCHW"))
    h = h + params["b_conv"][None, :, None, None]
    B, Cc, Hh, Ww = h.shape
    g = h.reshape(B, groups, Cc // groups, Hh, Ww)
    mean = g.mean(axis=(2, 3, 4), keepdims=True)
    var = g.var(axis=(2, 3, 4), keepdims=True)
    g = (g - mean) / jnp.sqrt(var + eps)
    h = g.reshape(B, Cc, Hh, Ww)
    h = h * params["gn_w"][None, :, None, None] + params["gn_b"][None, :, None, None]
    te = jax.nn.gelu(t_emb @ params["w_t"].T + params["b_t"], approximate=False)
    scale, shift = te[:, :OC], te[:, OC:]
    h = h * (scale[:, :, None, None] + 1.0) + shift[:, :, None, None]
    return jax.nn.gelu(h, approximate=False)


if __name__ == "__main__":
    # Small shapes consistent with the module (OUT_CH must be divisible by 8).
    B, IN_CH, OUT_CH, T_DIM, H, W = 2, 8, 16, 32, 8, 8

    key = jax.random.PRNGKey(0)
    ks = jax.random.split(key, 9)
    params = {
        "w_conv": 0.1 * jax.random.normal(ks[0], (OUT_CH, IN_CH + OUT_CH, 3, 3), jnp.float32),
        "b_conv": 0.1 * jax.random.normal(ks[1], (OUT_CH,), jnp.float32),
        "gn_w": 1.0 + 0.1 * jax.random.normal(ks[2], (OUT_CH,), jnp.float32),
        "gn_b": 0.1 * jax.random.normal(ks[3], (OUT_CH,), jnp.float32),
        "w_t": 0.1 * jax.random.normal(ks[4], (2 * OUT_CH, T_DIM), jnp.float32),
        "b_t": 0.1 * jax.random.normal(ks[5], (2 * OUT_CH,), jnp.float32),
    }
    x = jax.random.normal(ks[6], (B, IN_CH, H, W), jnp.float32)
    skip = jax.random.normal(ks[7], (B, OUT_CH, 2 * H, 2 * W), jnp.float32)
    t_emb = jax.random.normal(ks[8], (B, T_DIM), jnp.float32)

    ref = upblock_reference(x, skip, t_emb, params)

    # Default heuristic tile (single channel tile at this OC).
    out = jax.block_until_ready(upblock_forward(x, skip, t_emb, params))
    assert out.shape == (B, OUT_CH, 2 * H, 2 * W), out.shape
    err = float(jnp.max(jnp.abs(out.astype(jnp.float32) - ref)))
    # bf16 conv operands and bf16 output (f32 accumulation / stats / epilogue).
    assert err < 8e-2, f"max abs error too large: {err}"

    # Also exercise the channel-group-tile grid axis (2 tiles of 8 channels).
    out2 = jax.block_until_ready(upblock_forward(x, skip, t_emb, params, oc_tile=8))
    err2 = float(jnp.max(jnp.abs(out2.astype(jnp.float32) - ref)))
    assert err2 < 8e-2, f"max abs error too large (tiled): {err2}"

    print("KERNEL_OK")
</pallas_src>

<mosaic_0001>
module attributes {stable_mosaic.version = 11 : i64} {
  func.func @kernel(%arg0: i32, %arg1: i32, %arg2: memref<2x24x256xbf16, #tpu.memory_space<any>>, %arg3: memref<9x16x24xbf16, #tpu.memory_space<vmem>>, %arg4: memref<2x1x256xbf16, #tpu.memory_space<vmem>>, %arg5: memref<16x1xf32, #tpu.memory_space<vmem>>, %arg6: memref<1x16x1xf32, #tpu.memory_space<vmem>>, %arg7: memref<1x16x1xf32, #tpu.memory_space<vmem>>, %arg8: memref<1x16x256xbf16, #tpu.memory_space<vmem>>, %arg9: memref<24x512xbf16, #tpu.memory_space<vmem>>, %arg10: memref<!tpu.dma_semaphore, #tpu.memory_space<semaphore_mem>>) attributes {dimension_semantics = [#tpu.dimension_semantics<parallel>, #tpu.dimension_semantics<arbitrary>], iteration_bounds = array<i64: 2, 1>, scalar_prefetch = 0 : i64, scratch_operands = 2 : i64, tpu.core_type = #tpu.core_type<tc>, window_params = [{}, {transform_indices = @transform_1, window_bounds = array<i64: 9, 16, 24>}, {pipeline_mode = #tpu.pipeline_mode<synchronous>, transform_indices = @transform_2, window_bounds = array<i64: 2, 1, 256>}, {transform_indices = @transform_3, window_bounds = array<i64: 16, 1>}, {transform_indices = @transform_4, window_bounds = array<i64: 1, 16, 1>}, {transform_indices = @transform_5, window_bounds = array<i64: 1, 16, 1>}, {transform_indices = @transform_6, window_bounds = array<i64: 1, 16, 256>}]} {
    %c0_i32 = arith.constant 0 : i32
    %0 = arith.cmpi eq, %arg1, %c0_i32 : i32
    %1 = arith.extui %0 : i1 to i32
    %c0_i32_0 = arith.constant 0 : i32
    %2 = arith.cmpi ne, %1, %c0_i32_0 : i32
    scf.if %2 {
      %cst_138 = arith.constant 0.000000e+00 : bf16
      %326 = vector.broadcast %cst_138 : bf16 to vector<24x128xbf16>
      %c0_139 = arith.constant 0 : index
      %c0_140 = arith.constant 0 : index
      %327 = vector.load %arg9[%c0_139, %c0_140] : memref<24x512xbf16, #tpu.memory_space<vmem>>, vector<24x128xbf16>
      tpu.vector_store %arg9[%c0_139, %c0_140], %326 {strides = array<i32>} : memref<24x512xbf16, #tpu.memory_space<vmem>>, vector<24x128xbf16>,
      %cst_141 = arith.constant 0.000000e+00 : bf16
      %328 = vector.broadcast %cst_141 : bf16 to vector<24x128xbf16>
      %c0_142 = arith.constant 0 : index
      %c384 = arith.constant 384 : index
      %329 = vector.load %arg9[%c0_142, %c384] : memref<24x512xbf16, #tpu.memory_space<vmem>>, vector<24x128xbf16>
      tpu.vector_store %arg9[%c0_142, %c384], %328 {strides = array<i32>} : memref<24x512xbf16, #tpu.memory_space<vmem>>, vector<24x128xbf16>,
      %c0_i32_143 = arith.constant 0 : i32
      %c0_i32_144 = arith.constant 0 : i32
      %330 = tpu.memref_slice %arg2[%arg0, %c0_i32_143, %c0_i32_144] : memref<2x24x256xbf16, #tpu.memory_space<any>> -> memref<1x24x256xbf16, #tpu.memory_space<any>>
      %331 = tpu.memref_squeeze %330 : memref<1x24x256xbf16, #tpu.memory_space<any>> -> memref<24x256xbf16, #tpu.memory_space<any>>
      %c0_i32_145 = arith.constant 0 : i32
      %c128_i32 = arith.constant 128 : i32
      %332 = tpu.memref_slice %arg9[%c0_i32_145, %c128_i32] : memref<24x512xbf16, #tpu.memory_space<vmem>> -> memref<24x256xbf16, #tpu.memory_space<vmem>>
      tpu.enqueue_dma source(%331 : memref<24x256xbf16, #tpu.memory_space<any>>) target(%332 : memref<24x256xbf16, #tpu.memory_space<vmem>>) target_semaphore(%arg10 : memref<!tpu.dma_semaphore, #tpu.memory_space<semaphore_mem>>)
      %c0_i32_146 = arith.constant 0 : i32
      %c0_i32_147 = arith.constant 0 : i32
      %333 = tpu.memref_slice %arg2[%arg0, %c0_i32_146, %c0_i32_147] : memref<2x24x256xbf16, #tpu.memory_space<any>> -> memref<1x24x256xbf16, #tpu.memory_space<any>>
      %334 = tpu.memref_squeeze %333 : memref<1x24x256xbf16, #tpu.memory_space<any>> -> memref<24x256xbf16, #tpu.memory_space<any>>
      %c0_i32_148 = arith.constant 0 : i32
      %c128_i32_149 = arith.constant 128 : i32
      %335 = tpu.memref_slice %arg9[%c0_i32_148, %c128_i32_149] : memref<24x512xbf16, #tpu.memory_space<vmem>> -> memref<24x256xbf16, #tpu.memory_space<vmem>>
      tpu.wait_dma2 semaphore(%arg10 : memref<!tpu.dma_semaphore, #tpu.memory_space<semaphore_mem>>) src(%334 : memref<24x256xbf16, #tpu.memory_space<any>>) dst(%335 : memref<24x256xbf16, #tpu.memory_space<vmem>>)
    } else {
    }
    %cst = arith.constant 0.000000e+00 : f32
    %3 = vector.broadcast %cst : f32 to vector<16x256xf32>
    %c0 = arith.constant 0 : index
    %c111 = arith.constant 111 : index
    %4 = vector.load %arg9[%c0, %c111] : memref<24x512xbf16, #tpu.memory_space<vmem>>, vector<24x256xbf16>
    %c0_1 = arith.constant 0 : index
    %c0_2 = arith.constant 0 : index
    %c0_3 = arith.constant 0 : index
    %5 = vector.load %arg4[%c0_1, %c0_2, %c0_3] : memref<2x1x256xbf16, #tpu.memory_space<vmem>>, vector<1x1x256xbf16>
    %6 = vector.shape_cast %5 : vector<1x1x256xbf16> to vector<1x256xbf16>
    %7 = vector.broadcast %6 : vector<1x256xbf16> to vector<24x256xbf16>
    %8 = arith.mulf %4, %7 : vector<24x256xbf16>
    %c0_4 = arith.constant 0 : index
    %c0_5 = arith.constant 0 : index
    %c0_6 = arith.constant 0 : index
    %9 = vector.load %arg3[%c0_4, %c0_5, %c0_6] : memref<9x16x24xbf16, #tpu.memory_space<vmem>>, vector<1x16x24xbf16>
    %10 = vector.shape_cast %9 : vector<1x16x24xbf16> to vector<16x24xbf16>
    %cst_7 = arith.constant dense<0.000000e+00> : vector<16x256xf32>
    %11 = tpu.matmul %10, %8, %cst_7 {dimension_numbers = #tpu.dot_dimension_numbers<[1], [0], [0], [1], [0, 0, 1, 1], [], []>} : vector<16x24xbf16>, vector<24x256xbf16>, vector<16x256xf32> -> vector<16x256xf32>
    %12 = arith.addf %3, %11 : vector<16x256xf32>
    %c0_8 = arith.constant 0 : index
    %c112 = arith.constant 112 : index
    %13 = vector.load %arg9[%c0_8, %c112] : memref<24x512xbf16, #tpu.memory_space<vmem>>, vector<24x256xbf16>
    %c1 = arith.constant 1 : index
    %c0_9 = arith.constant 0 : index
    %c0_10 = arith.constant 0 : index
    %14 = vector.load %arg3[%c1, %c0_9, %c0_10] : memref<9x16x24xbf16, #tpu.memory_space<vmem>>, vector<1x16x24xbf16>
    %15 = vector.shape_cast %14 : vector<1x16x24xbf16> to vector<16x24xbf16>
    %cst_11 = arith.constant dense<0.000000e+00> : vector<16x256xf32>
    %16 = tpu.matmul %15, %13, %cst_11 {dimension_numbers = #tpu.dot_dimension_numbers<[1], [0], [0], [1], [0, 0, 1, 1], [], []>} : vector<16x24xbf16>, vector<24x256xbf16>, vector<16x256xf32> -> vector<16x256xf32>
    %17 = arith.addf %12, %16 : vector<16x256xf32>
    %c0_12 = arith.constant 0 : index
    %c113 = arith.constant 113 : index
    %18 = vector.load %arg9[%c0_12, %c113] : memref<24x512xbf16, #tpu.memory_space<vmem>>, vector<24x256xbf16>
    %c1_13 = arith.constant 1 : index
    %c0_14 = arith.constant 0 : index
    %c0_15 = arith.constant 0 : index
    %19 = vector.load %arg4[%c1_13, %c0_14, %c0_15] : memref<2x1x256xbf16, #tpu.memory_space<vmem>>, vector<1x1x256xbf16>
    %20 = vector.shape_cast %19 : vector<1x1x256xbf16> to vector<1x256xbf16>
    %21 = vector.broadcast %20 : vector<1x256xbf16> to vector<24x256xbf16>
    %22 = arith.mulf %18, %21 : vector<24x256xbf16>
    %c2 = arith.constant 2 : index
    %c0_16 = arith.constant 0 : index
    %c0_17 = arith.constant 0 : index
    %23 = vector.load %arg3[%c2, %c0_16, %c0_17] : memref<9x16x24xbf16, #tpu.memory_space<vmem>>, vector<1x16x24xbf16>
    %24 = vector.shape_cast %23 : vector<1x16x24xbf16> to vector<16x24xbf16>
    %cst_18 = arith.constant dense<0.000000e+00> : vector<16x256xf32>
    %25 = tpu.matmul %24, %22, %cst_18 {dimension_numbers = #tpu.dot_dimension_numbers<[1], [0], [0], [1], [0, 0, 1, 1], [], []>} : vector<16x24xbf16>, vector<24x256xbf16>, vector<16x256xf32> -> vector<16x256xf32>
    %26 = arith.addf %17, %25 : vector<16x256xf32>
    %c0_19 = arith.constant 0 : index
    %c127 = arith.constant 127 : index
    %27 = vector.load %arg9[%c0_19, %c127] : memref<24x512xbf16, #tpu.memory_space<vmem>>, vector<24x256xbf16>
    %c0_20 = arith.constant 0 : index
    %c0_21 = arith.constant 0 : index
    %c0_22 = arith.constant 0 : index
    %28 = vector.load %arg4[%c0_20, %c0_21, %c0_22] : memref<2x1x256xbf16, #tpu.memory_space<vmem>>, vector<1x1x256xbf16>
    %29 = vector.shape_cast %28 : vector<1x1x256xbf16> to vector<1x256xbf16>
    %30 = vector.broadcast %29 : vector<1x256xbf16> to vector<24x256xbf16>
    %31 = arith.mulf %27, %30 : vector<24x256xbf16>
    %c3 = arith.constant 3 : index
    %c0_23 = arith.constant 0 : index
    %c0_24 = arith.constant 0 : index
    %32 = vector.load %arg3[%c3, %c0_23, %c0_24] : memref<9x16x24xbf16, #tpu.memory_space<vmem>>, vector<1x16x24xbf16>
    %33 = vector.shape_cast %32 : vector<1x16x24xbf16> to vector<16x24xbf16>
    %cst_25 = arith.constant dense<0.000000e+00> : vector<16x256xf32>
    %34 = tpu.matmul %33, %31, %cst_25 {dimension_numbers = #tpu.dot_dimension_numbers<[1], [0], [0], [1], [0, 0, 1, 1], [], []>} : vector<16x24xbf16>, vector<24x256xbf16>, vector<16x256xf32> -> vector<16x256xf32>
    %35 = arith.addf %26, %34 : vector<16x256xf32>
    %c0_26 = arith.constant 0 : index
    %c128 = arith.constant 128 : index
    %36 = vector.load %arg9[%c0_26, %c128] : memref<24x512xbf16, #tpu.memory_space<vmem>>, vector<24x256xbf16>
    %c4 = arith.constant 4 : index
    %c0_27 = arith.constant 0 : index
    %c0_28 = arith.constant 0 : index
    %37 = vector.load %arg3[%c4, %c0_27, %c0_28] : memref<9x16x24xbf16, #tpu.memory_space<vmem>>, vector<1x16x24xbf16>
    %38 = vector.shape_cast %37 : vector<1x16x24xbf16> to vector<16x24xbf16>
    %cst_29 = arith.constant dense<0.000000e+00> : vector<16x256xf32>
    %39 = tpu.matmul %38, %36, %cst_29 {dimension_numbers = #tpu.dot_dimension_numbers<[1], [0], [0], [1], [0, 0, 1, 1], [], []>} : vector<16x24xbf16>, vector<24x256xbf16>, vector<16x256xf32> -> vector<16x256xf32>
    %40 = arith.addf %35, %39 : vector<16x256xf32>
    %c0_30 = arith.constant 0 : index
    %c129 = arith.constant 129 : index
    %41 = vector.load %arg9[%c0_30, %c129] : memref<24x512xbf16, #tpu.memory_space<vmem>>, vector<24x256xbf16>
    %c1_31 = arith.constant 1 : index
    %c0_32 = arith.constant 0 : index
    %c0_33 = arith.constant 0 : index
    %42 = vector.load %arg4[%c1_31, %c0_32, %c0_33] : memref<2x1x256xbf16, #tpu.memory_space<vmem>>, vector<1x1x256xbf16>
    %43 = vector.shape_cast %42 : vector<1x1x256xbf16> to vector<1x256xbf16>
    %44 = vector.broadcast %43 : vector<1x256xbf16> to vector<24x256xbf16>
    %45 = arith.mulf %41, %44 : vector<24x256xbf16>
    %c5 = arith.constant 5 : index
    %c0_34 = arith.constant 0 : index
    %c0_35 = arith.constant 0 : index
    %46 = vector.load %arg3[%c5, %c0_34, %c0_35] : memref<9x16x24xbf16, #tpu.memory_space<vmem>>, vector<1x16x24xbf16>
    %47 = vector.shape_cast %46 : vector<1x16x24xbf16> to vector<16x24xbf16>
    %cst_36 = arith.constant dense<0.000000e+00> : vector<16x256xf32>
    %48 = tpu.matmul %47, %45, %cst_36 {dimension_numbers = #tpu.dot_dimension_numbers<[1], [0], [0], [1], [0, 0, 1, 1], [], []>} : vector<16x24xbf16>, vector<24x256xbf16>, vector<16x256xf32> -> vector<16x256xf32>
    %49 = arith.addf %40, %48 : vector<16x256xf32>
    %c0_37 = arith.constant 0 : index
    %c143 = arith.constant 143 : index
    %50 = vector.load %arg9[%c0_37, %c143] : memref<24x512xbf16, #tpu.memory_space<vmem>>, vector<24x256xbf16>
    %c0_38 = arith.constant 0 : index
    %c0_39 = arith.constant 0 : index
    %c0_40 = arith.constant 0 : index
    %51 = vector.load %arg4[%c0_38, %c0_39, %c0_40] : memref<2x1x256xbf16, #tpu.memory_space<vmem>>, vector<1x1x256xbf16>
    %52 = vector.shape_cast %51 : vector<1x1x256xbf16> to vector<1x256xbf16>
    %53 = vector.broadcast %52 : vector<1x256xbf16> to vector<24x256xbf16>
    %54 = arith.mulf %50, %53 : vector<24x256xbf16>
    %c6 = arith.constant 6 : index
    %c0_41 = arith.constant 0 : index
    %c0_42 = arith.constant 0 : index
    %55 = vector.load %arg3[%c6, %c0_41, %c0_42] : memref<9x16x24xbf16, #tpu.memory_space<vmem>>, vector<1x16x24xbf16>
    %56 = vector.shape_cast %55 : vector<1x16x24xbf16> to vector<16x24xbf16>
    %cst_43 = arith.constant dense<0.000000e+00> : vector<16x256xf32>
    %57 = tpu.matmul %56, %54, %cst_43 {dimension_numbers = #tpu.dot_dimension_numbers<[1], [0], [0], [1], [0, 0, 1, 1], [], []>} : vector<16x24xbf16>, vector<24x256xbf16>, vector<16x256xf32> -> vector<16x256xf32>
    %58 = arith.addf %49, %57 : vector<16x256xf32>
    %c0_44 = arith.constant 0 : index
    %c144 = arith.constant 144 : index
    %59 = vector.load %arg9[%c0_44, %c144] : memref<24x512xbf16, #tpu.memory_space<vmem>>, vector<24x256xbf16>
    %c7 = arith.constant 7 : index
    %c0_45 = arith.constant 0 : index
    %c0_46 = arith.constant 0 : index
    %60 = vector.load %arg3[%c7, %c0_45, %c0_46] : memref<9x16x24xbf16, #tpu.memory_space<vmem>>, vector<1x16x24xbf16>
    %61 = vector.shape_cast %60 : vector<1x16x24xbf16> to vector<16x24xbf16>
    %cst_47 = arith.constant dense<0.000000e+00> : vector<16x256xf32>
    %62 = tpu.matmul %61, %59, %cst_47 {dimension_numbers = #tpu.dot_dimension_numbers<[1], [0], [0], [1], [0, 0, 1, 1], [], []>} : vector<16x24xbf16>, vector<24x256xbf16>, vector<16x256xf32> -> vector<16x256xf32>
    %63 = arith.addf %58, %62 : vector<16x256xf32>
    %c0_48 = arith.constant 0 : index
    %c145 = arith.constant 145 : index
    %64 = vector.load %arg9[%c0_48, %c145] : memref<24x512xbf16, #tpu.memory_space<vmem>>, vector<24x256xbf16>
    %c1_49 = arith.constant 1 : index
    %c0_50 = arith.constant 0 : index
    %c0_51 = arith.constant 0 : index
    %65 = vector.load %arg4[%c1_49, %c0_50, %c0_51] : memref<2x1x256xbf16, #tpu.memory_space<vmem>>, vector<1x1x256xbf16>
    %66 = vector.shape_cast %65 : vector<1x1x256xbf16> to vector<1x256xbf16>
    %67 = vector.broadcast %66 : vector<1x256xbf16> to vector<24x256xbf16>
    %68 = arith.mulf %64, %67 : vector<24x256xbf16>
    %c8 = arith.constant 8 : index
    %c0_52 = arith.constant 0 : index
    %c0_53 = arith.constant 0 : index
    %69 = vector.load %arg3[%c8, %c0_52, %c0_53] : memref<9x16x24xbf16, #tpu.memory_space<vmem>>, vector<1x16x24xbf16>
    %70 = vector.shape_cast %69 : vector<1x16x24xbf16> to vector<16x24xbf16>
    %cst_54 = arith.constant dense<0.000000e+00> : vector<16x256xf32>
    %71 = tpu.matmul %70, %68, %cst_54 {dimension_numbers = #tpu.dot_dimension_numbers<[1], [0], [0], [1], [0, 0, 1, 1], [], []>} : vector<16x24xbf16>, vector<24x256xbf16>, vector<16x256xf32> -> vector<16x256xf32>
    %72 = arith.addf %63, %71 : vector<16x256xf32>
    %c0_55 = arith.constant 0 : index
    %c0_56 = arith.constant 0 : index
    %73 = vector.load %arg5[%c0_55, %c0_56] : memref<16x1xf32, #tpu.memory_space<vmem>>, vector<16x1xf32>
    %74 = vector.broadcast %73 : vector<16x1xf32> to vector<16x256xf32>
    %75 = arith.addf %72, %74 : vector<16x256xf32>
    %cst_57 = arith.constant dense<0.000000e+00> : vector<16xf32>
    %76 = vector.multi_reduction <add>, %75, %cst_57 [1] : vector<16x256xf32> to vector<16xf32>
    %77 = vector.shape_cast %76 : vector<16xf32> to vector<16x1xf32>
    %78 = arith.mulf %75, %75 : vector<16x256xf32>
    %cst_58 = arith.constant dense<0.000000e+00> : vector<16xf32>
    %79 = vector.multi_reduction <add>, %78, %cst_58 [1] : vector<16x256xf32> to vector<16xf32>
    %80 = vector.shape_cast %79 : vector<16xf32> to vector<16x1xf32>
    %81 = tpu.iota {dimensions = array<i32: 0>} : vector<16x1xi32>
    %cst_59 = arith.constant 0.000000e+00 : f32
    %82 = vector.broadcast %cst_59 : f32 to vector<16x1xf32>
    %cst_60 = arith.constant 0.000000e+00 : f32
    %83 = vector.broadcast %cst_60 : f32 to vector<16x1xf32>
    %c0_i32_61 = arith.constant 0 : i32
    %84 = vector.broadcast %c0_i32_61 : i32 to vector<16x1xi32>
    %85 = arith.cmpi sge, %81, %84 : vector<16x1xi32>
    %c2_i32 = arith.constant 2 : i32
    %86 = vector.broadcast %c2_i32 : i32 to vector<16x1xi32>
    %87 = arith.cmpi slt, %81, %86 : vector<16x1xi32>
    %88 = arith.andi %85, %87 : vector<16x1xi1>
    %cst_62 = arith.constant 0.000000e+00 : f32
    %89 = vector.broadcast %cst_62 : f32 to vector<16x1xf32>
    %90 = arith.select %88, %77, %89 : vector<16x1xi1>, vector<16x1xf32>
    %cst_63 = arith.constant dense<0.000000e+00> : vector<1xf32>
    %91 = vector.multi_reduction <add>, %90, %cst_63 [0] : vector<16x1xf32> to vector<1xf32>
    %92 = vector.shape_cast %91 : vector<1xf32> to vector<1x1xf32>
    %cst_64 = arith.constant 0.000000e+00 : f32
    %93 = vector.broadcast %cst_64 : f32 to vector<16x1xf32>
    %94 = arith.select %88, %80, %93 : vector<16x1xi1>, vector<16x1xf32>
    %cst_65 = arith.constant dense<0.000000e+00> : vector<1xf32>
    %95 = vector.multi_reduction <add>, %94, %cst_65 [0] : vector<16x1xf32> to vector<1xf32>
    %96 = vector.shape_cast %95 : vector<1xf32> to vector<1x1xf32>
    %cst_66 = arith.constant 0.001953125 : f32
    %97 = vector.broadcast %cst_66 : f32 to vector<1x1xf32>
    %98 = arith.mulf %92, %97 : vector<1x1xf32>
    %cst_67 = arith.constant 0.001953125 : f32
    %99 = vector.broadcast %cst_67 : f32 to vector<1x1xf32>
    %100 = arith.mulf %96, %99 : vector<1x1xf32>
    %101 = arith.mulf %98, %98 : vector<1x1xf32>
    %102 = arith.subf %100, %101 : vector<1x1xf32>
    %cst_68 = arith.constant 0.000000e+00 : f32
    %103 = vector.broadcast %cst_68 : f32 to vector<1x1xf32>
    %104 = arith.maximumf %102, %103 : vector<1x1xf32>
    %105 = vector.shape_cast %98 : vector<1x1xf32> to vector<1x1xf32>
    %106 = vector.broadcast %105 : vector<1x1xf32> to vector<16x1xf32>
    %107 = arith.select %88, %106, %82 : vector<16x1xi1>, vector<16x1xf32>
    %108 = vector.shape_cast %104 : vector<1x1xf32> to vector<1x1xf32>
    %109 = vector.broadcast %108 : vector<1x1xf32> to vector<16x1xf32>
    %110 = arith.select %88, %109, %83 : vector<16x1xi1>, vector<16x1xf32>
    %c2_i32_69 = arith.constant 2 : i32
    %111 = vector.broadcast %c2_i32_69 : i32 to vector<16x1xi32>
    %112 = arith.cmpi sge, %81, %111 : vector<16x1xi32>
    %c4_i32 = arith.constant 4 : i32
    %113 = vector.broadcast %c4_i32 : i32 to vector<16x1xi32>
    %114 = arith.cmpi slt, %81, %113 : vector<16x1xi32>
    %115 = arith.andi %112, %114 : vector<16x1xi1>
    %cst_70 = arith.constant 0.000000e+00 : f32
    %116 = vector.broadcast %cst_70 : f32 to vector<16x1xf32>
    %117 = arith.select %115, %77, %116 : vector<16x1xi1>, vector<16x1xf32>
    %cst_71 = arith.constant dense<0.000000e+00> : vector<1xf32>
    %118 = vector.multi_reduction <add>, %117, %cst_71 [0] : vector<16x1xf32> to vector<1xf32>
    %119 = vector.shape_cast %118 : vector<1xf32> to vector<1x1xf32>
    %cst_72 = arith.constant 0.000000e+00 : f32
    %120 = vector.broadcast %cst_72 : f32 to vector<16x1xf32>
    %121 = arith.select %115, %80, %120 : vector<16x1xi1>, vector<16x1xf32>
    %cst_73 = arith.constant dense<0.000000e+00> : vector<1xf32>
    %122 = vector.multi_reduction <add>, %121, %cst_73 [0] : vector<16x1xf32> to vector<1xf32>
    %123 = vector.shape_cast %122 : vector<1xf32> to vector<1x1xf32>
    %cst_74 = arith.constant 0.001953125 : f32
    %124 = vector.broadcast %cst_74 : f32 to vector<1x1xf32>
    %125 = arith.mulf %119, %124 : vector<1x1xf32>
    %cst_75 = arith.constant 0.001953125 : f32
    %126 = vector.broadcast %cst_75 : f32 to vector<1x1xf32>
    %127 = arith.mulf %123, %126 : vector<1x1xf32>
    %128 = arith.mulf %125, %125 : vector<1x1xf32>
    %129 = arith.subf %127, %128 : vector<1x1xf32>
    %cst_76 = arith.constant 0.000000e+00 : f32
    %130 = vector.broadcast %cst_76 : f32 to vector<1x1xf32>
    %131 = arith.maximumf %129, %130 : vector<1x1xf32>
    %132 = vector.shape_cast %125 : vector<1x1xf32> to vector<1x1xf32>
    %133 = vector.broadcast %132 : vector<1x1xf32> to vector<16x1xf32>
    %134 = arith.select %115, %133, %107 : vector<16x1xi1>, vector<16x1xf32>
    %135 = vector.shape_cast %131 : vector<1x1xf32> to vector<1x1xf32>
    %136 = vector.broadcast %135 : vector<1x1xf32> to vector<16x1xf32>
    %137 = arith.select %115, %136, %110 : vector<16x1xi1>, vector<16x1xf32>
    %c4_i32_77 = arith.constant 4 : i32
    %138 = vector.broadcast %c4_i32_77 : i32 to vector<16x1xi32>
    %139 = arith.cmpi sge, %81, %138 : vector<16x1xi32>
    %c6_i32 = arith.constant 6 : i32
    %140 = vector.broadcast %c6_i32 : i32 to vector<16x1xi32>
    %141 = arith.cmpi slt, %81, %140 : vector<16x1xi32>
    %142 = arith.andi %139, %141 : vector<16x1xi1>
    %cst_78 = arith.constant 0.000000e+00 : f32
    %143 = vector.broadcast %cst_78 : f32 to vector<16x1xf32>
    %144 = arith.select %142, %77, %143 : vector<16x1xi1>, vector<16x1xf32>
    %cst_79 = arith.constant dense<0.000000e+00> : vector<1xf32>
    %145 = vector.multi_reduction <add>, %144, %cst_79 [0] : vector<16x1xf32> to vector<1xf32>
    %146 = vector.shape_cast %145 : vector<1xf32> to vector<1x1xf32>
    %cst_80 = arith.constant 0.000000e+00 : f32
    %147 = vector.broadcast %cst_80 : f32 to vector<16x1xf32>
    %148 = arith.select %142, %80, %147 : vector<16x1xi1>, vector<16x1xf32>
    %cst_81 = arith.constant dense<0.000000e+00> : vector<1xf32>
    %149 = vector.multi_reduction <add>, %148, %cst_81 [0] : vector<16x1xf32> to vector<1xf32>
    %150 = vector.shape_cast %149 : vector<1xf32> to vector<1x1xf32>
    %cst_82 = arith.constant 0.001953125 : f32
    %151 = vector.broadcast %cst_82 : f32 to vector<1x1xf32>
    %152 = arith.mulf %146, %151 : vector<1x1xf32>
    %cst_83 = arith.constant 0.001953125 : f32
    %153 = vector.broadcast %cst_83 : f32 to vector<1x1xf32>
    %154 = arith.mulf %150, %153 : vector<1x1xf32>
    %155 = arith.mulf %152, %152 : vector<1x1xf32>
    %156 = arith.subf %154, %155 : vector<1x1xf32>
    %cst_84 = arith.constant 0.000000e+00 : f32
    %157 = vector.broadcast %cst_84 : f32 to vector<1x1xf32>
    %158 = arith.maximumf %156, %157 : vector<1x1xf32>
    %159 = vector.shape_cast %152 : vector<1x1xf32> to vector<1x1xf32>
    %160 = vector.broadcast %159 : vector<1x1xf32> to vector<16x1xf32>
    %161 = arith.select %142, %160, %134 : vector<16x1xi1>, vector<16x1xf32>
    %162 = vector.shape_cast %158 : vector<1x1xf32> to vector<1x1xf32>
    %163 = vector.broadcast %162 : vector<1x1xf32> to vector<16x1xf32>
    %164 = arith.select %142, %163, %137 : vector<16x1xi1>, vector<16x1xf32>
    %c6_i32_85 = arith.constant 6 : i32
    %165 = vector.broadcast %c6_i32_85 : i32 to vector<16x1xi32>
    %166 = arith.cmpi sge, %81, %165 : vector<16x1xi32>
    %c8_i32 = arith.constant 8 : i32
    %167 = vector.broadcast %c8_i32 : i32 to vector<16x1xi32>
    %168 = arith.cmpi slt, %81, %167 : vector<16x1xi32>
    %169 = arith.andi %166, %168 : vector<16x1xi1>
    %cst_86 = arith.constant 0.000000e+00 : f32
    %170 = vector.broadcast %cst_86 : f32 to vector<16x1xf32>
    %171 = arith.select %169, %77, %170 : vector<16x1xi1>, vector<16x1xf32>
    %cst_87 = arith.constant dense<0.000000e+00> : vector<1xf32>
    %172 = vector.multi_reduction <add>, %171, %cst_87 [0] : vector<16x1xf32> to vector<1xf32>
    %173 = vector.shape_cast %172 : vector<1xf32> to vector<1x1xf32>
    %cst_88 = arith.constant 0.000000e+00 : f32
    %174 = vector.broadcast %cst_88 : f32 to vector<16x1xf32>
    %175 = arith.select %169, %80, %174 : vector<16x1xi1>, vector<16x1xf32>
    %cst_89 = arith.constant dense<0.000000e+00> : vector<1xf32>
    %176 = vector.multi_reduction <add>, %175, %cst_89 [0] : vector<16x1xf32> to vector<1xf32>
    %177 = vector.shape_cast %176 : vector<1xf32> to vector<1x1xf32>
    %cst_90 = arith.constant 0.001953125 : f32
    %178 = vector.broadcast %cst_90 : f32 to vector<1x1xf32>
    %179 = arith.mulf %173, %178 : vector<1x1xf32>
    %cst_91 = arith.constant 0.001953125 : f32
    %180 = vector.broadcast %cst_91 : f32 to vector<1x1xf32>
    %181 = arith.mulf %177, %180 : vector<1x1xf32>
    %182 = arith.mulf %179, %179 : vector<1x1xf32>
    %183 = arith.subf %181, %182 : vector<1x1xf32>
    %cst_92 = arith.constant 0.000000e+00 : f32
    %184 = vector.broadcast %cst_92 : f32 to vector<1x1xf32>
    %185 = arith.maximumf %183, %184 : vector<1x1xf32>
    %186 = vector.shape_cast %179 : vector<1x1xf32> to vector<1x1xf32>
    %187 = vector.broadcast %186 : vector<1x1xf32> to vector<16x1xf32>
    %188 = arith.select %169, %187, %161 : vector<16x1xi1>, vector<16x1xf32>
    %189 = vector.shape_cast %185 : vector<1x1xf32> to vector<1x1xf32>
    %190 = vector.broadcast %189 : vector<1x1xf32> to vector<16x1xf32>
    %191 = arith.select %169, %190, %164 : vector<16x1xi1>, vector<16x1xf32>
    %c8_i32_93 = arith.constant 8 : i32
    %192 = vector.broadcast %c8_i32_93 : i32 to vector<16x1xi32>
    %193 = arith.cmpi sge, %81, %192 : vector<16x1xi32>
    %c10_i32 = arith.constant 10 : i32
    %194 = vector.broadcast %c10_i32 : i32 to vector<16x1xi32>
    %195 = arith.cmpi slt, %81, %194 : vector<16x1xi32>
    %196 = arith.andi %193, %195 : vector<16x1xi1>
    %cst_94 = arith.constant 0.000000e+00 : f32
    %197 = vector.broadcast %cst_94 : f32 to vector<16x1xf32>
    %198 = arith.select %196, %77, %197 : vector<16x1xi1>, vector<16x1xf32>
    %cst_95 = arith.constant dense<0.000000e+00> : vector<1xf32>
    %199 = vector.multi_reduction <add>, %198, %cst_95 [0] : vector<16x1xf32> to vector<1xf32>
    %200 = vector.shape_cast %199 : vector<1xf32> to vector<1x1xf32>
    %cst_96 = arith.constant 0.000000e+00 : f32
    %201 = vector.broadcast %cst_96 : f32 to vector<16x1xf32>
    %202 = arith.select %196, %80, %201 : vector<16x1xi1>, vector<16x1xf32>
    %cst_97 = arith.constant dense<0.000000e+00> : vector<1xf32>
    %203 = vector.multi_reduction <add>, %202, %cst_97 [0] : vector<16x1xf32> to vector<1xf32>
    %204 = vector.shape_cast %203 : vector<1xf32> to vector<1x1xf32>
    %cst_98 = arith.constant 0.001953125 : f32
    %205 = vector.broadcast %cst_98 : f32 to vector<1x1xf32>
    %206 = arith.mulf %200, %205 : vector<1x1xf32>
    %cst_99 = arith.constant 0.001953125 : f32
    %207 = vector.broadcast %cst_99 : f32 to vector<1x1xf32>
    %208 = arith.mulf %204, %207 : vector<1x1xf32>
    %209 = arith.mulf %206, %206 : vector<1x1xf32>
    %210 = arith.subf %208, %209 : vector<1x1xf32>
    %cst_100 = arith.constant 0.000000e+00 : f32
    %211 = vector.broadcast %cst_100 : f32 to vector<1x1xf32>
    %212 = arith.maximumf %210, %211 : vector<1x1xf32>
    %213 = vector.shape_cast %206 : vector<1x1xf32> to vector<1x1xf32>
    %214 = vector.broadcast %213 : vector<1x1xf32> to vector<16x1xf32>
    %215 = arith.select %196, %214, %188 : vector<16x1xi1>, vector<16x1xf32>
    %216 = vector.shape_cast %212 : vector<1x1xf32> to vector<1x1xf32>
    %217 = vector.broadcast %216 : vector<1x1xf32> to vector<16x1xf32>
    %218 = arith.select %196, %217, %191 : vector<16x1xi1>, vector<16x1xf32>
    %c10_i32_101 = arith.constant 10 : i32
    %219 = vector.broadcast %c10_i32_101 : i32 to vector<16x1xi32>
    %220 = arith.cmpi sge, %81, %219 : vector<16x1xi32>
    %c12_i32 = arith.constant 12 : i32
    %221 = vector.broadcast %c12_i32 : i32 to vector<16x1xi32>
    %222 = arith.cmpi slt, %81, %221 : vector<16x1xi32>
    %223 = arith.andi %220, %222 : vector<16x1xi1>
    %cst_102 = arith.constant 0.000000e+00 : f32
    %224 = vector.broadcast %cst_102 : f32 to vector<16x1xf32>
    %225 = arith.select %223, %77, %224 : vector<16x1xi1>, vector<16x1xf32>
    %cst_103 = arith.constant dense<0.000000e+00> : vector<1xf32>
    %226 = vector.multi_reduction <add>, %225, %cst_103 [0] : vector<16x1xf32> to vector<1xf32>
    %227 = vector.shape_cast %226 : vector<1xf32> to vector<1x1xf32>
    %cst_104 = arith.constant 0.000000e+00 : f32
    %228 = vector.broadcast %cst_104 : f32 to vector<16x1xf32>
    %229 = arith.select %223, %80, %228 : vector<16x1xi1>, vector<16x1xf32>
    %cst_105 = arith.constant dense<0.000000e+00> : vector<1xf32>
    %230 = vector.multi_reduction <add>, %229, %cst_105 [0] : vector<16x1xf32> to vector<1xf32>
    %231 = vector.shape_cast %230 : vector<1xf32> to vector<1x1xf32>
    %cst_106 = arith.constant 0.001953125 : f32
    %232 = vector.broadcast %cst_106 : f32 to vector<1x1xf32>
    %233 = arith.mulf %227, %232 : vector<1x1xf32>
    %cst_107 = arith.constant 0.001953125 : f32
    %234 = vector.broadcast %cst_107 : f32 to vector<1x1xf32>
    %235 = arith.mulf %231, %234 : vector<1x1xf32>
    %236 = arith.mulf %233, %233 : vector<1x1xf32>
    %237 = arith.subf %235, %236 : vector<1x1xf32>
    %cst_108 = arith.constant 0.000000e+00 : f32
    %238 = vector.broadcast %cst_108 : f32 to vector<1x1xf32>
    %239 = arith.maximumf %237, %238 : vector<1x1xf32>
    %240 = vector.shape_cast %233 : vector<1x1xf32> to vector<1x1xf32>
    %241 = vector.broadcast %240 : vector<1x1xf32> to vector<16x1xf32>
    %242 = arith.select %223, %241, %215 : vector<16x1xi1>, vector<16x1xf32>
    %243 = vector.shape_cast %239 : vector<1x1xf32> to vector<1x1xf32>
    %244 = vector.broadcast %243 : vector<1x1xf32> to vector<16x1xf32>
    %245 = arith.select %223, %244, %218 : vector<16x1xi1>, vector<16x1xf32>
    %c12_i32_109 = arith.constant 12 : i32
    %246 = vector.broadcast %c12_i32_109 : i32 to vector<16x1xi32>
    %247 = arith.cmpi sge, %81, %246 : vector<16x1xi32>
    %c14_i32 = arith.constant 14 : i32
    %248 = vector.broadcast %c14_i32 : i32 to vector<16x1xi32>
    %249 = arith.cmpi slt, %81, %248 : vector<16x1xi32>
    %250 = arith.andi %247, %249 : vector<16x1xi1>
    %cst_110 = arith.constant 0.000000e+00 : f32
    %251 = vector.broadcast %cst_110 : f32 to vector<16x1xf32>
    %252 = arith.select %250, %77, %251 : vector<16x1xi1>, vector<16x1xf32>
    %cst_111 = arith.constant dense<0.000000e+00> : vector<1xf32>
    %253 = vector.multi_reduction <add>, %252, %cst_111 [0] : vector<16x1xf32> to vector<1xf32>
    %254 = vector.shape_cast %253 : vector<1xf32> to vector<1x1xf32>
    %cst_112 = arith.constant 0.000000e+00 : f32
    %255 = vector.broadcast %cst_112 : f32 to vector<16x1xf32>
    %256 = arith.select %250, %80, %255 : vector<16x1xi1>, vector<16x1xf32>
    %cst_113 = arith.constant dense<0.000000e+00> : vector<1xf32>
    %257 = vector.multi_reduction <add>, %256, %cst_113 [0] : vector<16x1xf32> to vector<1xf32>
    %258 = vector.shape_cast %257 : vector<1xf32> to vector<1x1xf32>
    %cst_114 = arith.constant 0.001953125 : f32
    %259 = vector.broadcast %cst_114 : f32 to vector<1x1xf32>
    %260 = arith.mulf %254, %259 : vector<1x1xf32>
    %cst_115 = arith.constant 0.001953125 : f32
    %261 = vector.broadcast %cst_115 : f32 to vector<1x1xf32>
    %262 = arith.mulf %258, %261 : vector<1x1xf32>
    %263 = arith.mulf %260, %260 : vector<1x1xf32>
    %264 = arith.subf %262, %263 : vector<1x1xf32>
    %cst_116 = arith.constant 0.000000e+00 : f32
    %265 = vector.broadcast %cst_116 : f32 to vector<1x1xf32>
    %266 = arith.maximumf %264, %265 : vector<1x1xf32>
    %267 = vector.shape_cast %260 : vector<1x1xf32> to vector<1x1xf32>
    %268 = vector.broadcast %267 : vector<1x1xf32> to vector<16x1xf32>
    %269 = arith.select %250, %268, %242 : vector<16x1xi1>, vector<16x1xf32>
    %270 = vector.shape_cast %266 : vector<1x1xf32> to vector<1x1xf32>
    %271 = vector.broadcast %270 : vector<1x1xf32> to vector<16x1xf32>
    %272 = arith.select %250, %271, %245 : vector<16x1xi1>, vector<16x1xf32>
    %c14_i32_117 = arith.constant 14 : i32
    %273 = vector.broadcast %c14_i32_117 : i32 to vector<16x1xi32>
    %274 = arith.cmpi sge, %81, %273 : vector<16x1xi32>
    %c16_i32 = arith.constant 16 : i32
    %275 = vector.broadcast %c16_i32 : i32 to vector<16x1xi32>
    %276 = arith.cmpi slt, %81, %275 : vector<16x1xi32>
    %277 = arith.andi %274, %276 : vector<16x1xi1>
    %cst_118 = arith.constant 0.000000e+00 : f32
    %278 = vector.broadcast %cst_118 : f32 to vector<16x1xf32>
    %279 = arith.select %277, %77, %278 : vector<16x1xi1>, vector<16x1xf32>
    %cst_119 = arith.constant dense<0.000000e+00> : vector<1xf32>
    %280 = vector.multi_reduction <add>, %279, %cst_119 [0] : vector<16x1xf32> to vector<1xf32>
    %281 = vector.shape_cast %280 : vector<1xf32> to vector<1x1xf32>
    %cst_120 = arith.constant 0.000000e+00 : f32
    %282 = vector.broadcast %cst_120 : f32 to vector<16x1xf32>
    %283 = arith.select %277, %80, %282 : vector<16x1xi1>, vector<16x1xf32>
    %cst_121 = arith.constant dense<0.000000e+00> : vector<1xf32>
    %284 = vector.multi_reduction <add>, %283, %cst_121 [0] : vector<16x1xf32> to vector<1xf32>
    %285 = vector.shape_cast %284 : vector<1xf32> to vector<1x1xf32>
    %cst_122 = arith.constant 0.001953125 : f32
    %286 = vector.broadcast %cst_122 : f32 to vector<1x1xf32>
    %287 = arith.mulf %281, %286 : vector<1x1xf32>
    %cst_123 = arith.constant 0.001953125 : f32
    %288 = vector.broadcast %cst_123 : f32 to vector<1x1xf32>
    %289 = arith.mulf %285, %288 : vector<1x1xf32>
    %290 = arith.mulf %287, %287 : vector<1x1xf32>
    %291 = arith.subf %289, %290 : vector<1x1xf32>
    %cst_124 = arith.constant 0.000000e+00 : f32
    %292 = vector.broadcast %cst_124 : f32 to vector<1x1xf32>
    %293 = arith.maximumf %291, %292 : vector<1x1xf32>
    %294 = vector.shape_cast %287 : vector<1x1xf32> to vector<1x1xf32>
    %295 = vector.broadcast %294 : vector<1x1xf32> to vector<16x1xf32>
    %296 = arith.select %277, %295, %269 : vector<16x1xi1>, vector<16x1xf32>
    %297 = vector.shape_cast %293 : vector<1x1xf32> to vector<1x1xf32>
    %298 = vector.broadcast %297 : vector<1x1xf32> to vector<16x1xf32>
    %299 = arith.select %277, %298, %272 : vector<16x1xi1>, vector<16x1xf32>
    %cst_125 = arith.constant 9.99999974E-6 : f32
    %300 = vector.broadcast %cst_125 : f32 to vector<16x1xf32>
    %301 = arith.addf %299, %300 : vector<16x1xf32>
    %302 = math.rsqrt %301 : vector<16x1xf32>
    %c0_126 = arith.constant 0 : index
    %c0_127 = arith.constant 0 : index
    %c0_128 = arith.constant 0 : index
    %303 = vector.load %arg6[%c0_126, %c0_127, %c0_128] : memref<1x16x1xf32, #tpu.memory_space<vmem>>, vector<1x16x1xf32>
    %304 = vector.shape_cast %303 : vector<1x16x1xf32> to vector<16x1xf32>
    %305 = arith.mulf %302, %304 : vector<16x1xf32>
    %c0_129 = arith.constant 0 : index
    %c0_130 = arith.constant 0 : index
    %c0_131 = arith.constant 0 : index
    %306 = vector.load %arg7[%c0_129, %c0_130, %c0_131] : memref<1x16x1xf32, #tpu.memory_space<vmem>>, vector<1x16x1xf32>
    %307 = vector.shape_cast %306 : vector<1x16x1xf32> to vector<16x1xf32>
    %308 = arith.mulf %296, %305 : vector<16x1xf32>
    %309 = arith.subf %307, %308 : vector<16x1xf32>
    %310 = vector.broadcast %305 : vector<16x1xf32> to vector<16x256xf32>
    %311 = arith.mulf %75, %310 : vector<16x256xf32>
    %312 = vector.broadcast %309 : vector<16x1xf32> to vector<16x256xf32>
    %313 = arith.addf %311, %312 : vector<16x256xf32>
    %cst_132 = arith.constant 5.000000e-01 : f32
    %314 = vector.broadcast %cst_132 : f32 to vector<16x256xf32>
    %315 = arith.mulf %314, %313 : vector<16x256xf32>
    %cst_133 = arith.constant 0.707106769 : f32
    %316 = vector.broadcast %cst_133 : f32 to vector<16x256xf32>
    %317 = arith.mulf %313, %316 : vector<16x256xf32>
    %318 = math.erf %317 : vector<16x256xf32>
    %cst_134 = arith.constant 1.000000e+00 : f32
    %319 = vector.broadcast %cst_134 : f32 to vector<16x256xf32>
    %320 = arith.addf %319, %318 : vector<16x256xf32>
    %321 = arith.mulf %315, %320 : vector<16x256xf32>
    %322 = arith.truncf %321 : vector<16x256xf32> to vector<16x256xbf16>
    %c0_135 = arith.constant 0 : index
    %c0_136 = arith.constant 0 : index
    %c0_137 = arith.constant 0 : index
    %323 = vector.load %arg8[%c0_135, %c0_136, %c0_137] : memref<1x16x256xbf16, #tpu.memory_space<vmem>>, vector<1x16x256xbf16>
    %324 = vector.shape_cast %323 : vector<1x16x256xbf16> to vector<16x256xbf16>
    %325 = vector.shape_cast %322 : vector<16x256xbf16> to vector<1x16x256xbf16>
    tpu.vector_store %arg8[%c0_135, %c0_136, %c0_137], %325 {strides = array<i32>} : memref<1x16x256xbf16, #tpu.memory_space<vmem>>, vector<1x16x256xbf16>,
    return
  }
  func.func @transform_1(%arg0: i32, %arg1: i32) -> (i32, i32, i32) {
    %c0_i32 = arith.constant 0 : i32
    %c0_i32_0 = arith.constant 0 : i32
    %c0_i32_1 = arith.constant 0 : i32
    return %c0_i32, %arg1, %c0_i32_0 : i32, i32, i32
  }
  func.func @transform_2(%arg0: i32, %arg1: i32) -> (i32, i32, i32) {
    %c0_i32 = arith.constant 0 : i32
    %c0_i32_0 = arith.constant 0 : i32
    %c0_i32_1 = arith.constant 0 : i32
    %c0_i32_2 = arith.constant 0 : i32
    return %c0_i32, %c0_i32_0, %c0_i32_1 : i32, i32, i32
  }
  func.func @transform_3(%arg0: i32, %arg1: i32) -> (i32, i32) {
    %c0_i32 = arith.constant 0 : i32
    %c0_i32_0 = arith.constant 0 : i32
    return %arg1, %c0_i32 : i32, i32
  }
  func.func @transform_4(%arg0: i32, %arg1: i32) -> (i32, i32, i32) {
    %c0_i32 = arith.constant 0 : i32
    %c0_i32_0 = arith.constant 0 : i32
    return %arg0, %arg1, %c0_i32 : i32, i32, i32
  }
  func.func @transform_5(%arg0: i32, %arg1: i32) -> (i32, i32, i32) {
    %c0_i32 = arith.constant 0 : i32
    %c0_i32_0 = arith.constant 0 : i32
    return %arg0, %arg1, %c0_i32 : i32, i32, i32
  }
  func.func @transform_6(%arg0: i32, %arg1: i32) -> (i32, i32, i32) {
    %c0_i32 = arith.constant 0 : i32
    %c0_i32_0 = arith.constant 0 : i32
    return %arg0, %arg1, %c0_i32 : i32, i32, i32
  }
}

</mosaic_0001>

<llo_original>
// kernel: upblock_forward.1
$region0: #{upblock_forward.1}
  #allocation0 [shape = 'u32[]', space=smem, size = 0x4, offset = 0x4, fixed_abs, tag = 'smem constant byte address 0x4 - core index']
  #allocation1 [shape = 'u32[72,128]{1,0:T(1,128)}', space=vmem, size = 0x9000, scoped, tag = 'internal scratch']
  #allocation2 [shape = 'bf16[24,512]{1,0:T(8,128)(2,1)}', space=vmem, size = 0x6000, scoped, tag = 'scratch operand']
  #allocation3 [shape = 's32[1]{0}', space=sflag, size = 0x4, scoped, tag = 'scratch operand']
  #allocation4 [shape = 's32[]', space=sflag, size = 0x4, offset = 0, fixed_abs, tag = 'sflag constant byte address 0x0 - dummy sync flag']
  %s0 = inlined_call_operand.vmem [shape: bf16[2,24,256], index: 0, kind: input, shape index: {}]
  %s1 = inlined_call_operand.vmem [shape: bf16[9,16,24], index: 1, kind: input, shape index: {}]
  %s2 = inlined_call_operand.vmem [shape: bf16[2,1,256], index: 2, kind: input, shape index: {}]
  %s3 = inlined_call_operand.vmem [shape: f32[16,1], index: 3, kind: input, shape index: {}]
  %s4 = inlined_call_operand.vmem [shape: f32[2,16,1], index: 4, kind: input, shape index: {}]
  %s5 = inlined_call_operand.vmem [shape: f32[2,16,1], index: 5, kind: input, shape index: {}]
  %s6 = inlined_call_operand.vmem [shape: bf16[2,16,256], index: 6, kind: output, shape index: {}]
  %s7 = sld [smem:[#allocation0]]
  $region91: #{upblock_forward.1} parent=0
    _
  %s9 = ssub.s32 1, %s7
  %s10 = scalar_select 0, %s9, %s7
  loop: start=0, step=1, limit=4
  $region2: #{upblock_forward.1} parent=0 // loop_pre_header
    _
  $region3: #{upblock_forward.1} parent=0 // loop_header
    %s12 = sphi 0, %s16
    %p13 = scmp.ge.s32.totalorder %s12, 4
    %s19 = sphi 0, %s31
    %s20 = sphi 0, %s27
    %s21 = sphi 0, %s19
    %s22 = sphi 0, %s20
    %s23 = sphi 0, %s21
    %s24 = sphi 0, %s22
    %s34 = sphi 0, %s36
    %s37 = sphi 0, %s34
    %s38 = sphi 0, %s37
    %s54 = sphi 0, %s38
    %s58 = sphi 0, %s58
    %s60 = sphi 0, %s58
    %s61 = sphi 0, %s60
    %s75 = sphi 0, %s61
    %s81 = sphi 0, %s83
    %s84 = sphi 0, %s81
    %s85 = sphi 0, %s84
    %s101 = sphi 0, %s85
    %s109 = sphi 0, %s111
    %s112 = sphi 0, %s109
    %s113 = sphi 0, %s112
    %s129 = sphi 0, %s113
    %s137 = sphi 0, %s139
    %s140 = sphi 0, %s137
    %s141 = sphi 0, %s140
    %s157 = sphi 0, %s141
    %s165 = sphi 0, %s167
    %s168 = sphi 0, %s165
    %s169 = sphi 0, %s168
    %s185 = sphi 0, %s169
  $region4: #{upblock_forward.1} parent=0 // loop_header_branch
    %15 = sbr.rel (%p13) target = $region8
  $region5: #{upblock_forward.1} parent=0 // loop_body
    %s17 = ssub.s32 %s12, 1
    %s18 = ssub.s32 %s12, 2
    %s25 = sadd.s32 1, %s20
    %p26 = scmp.ge.s32.totalorder %s25, 1
    %s27 = scalar_select %p26, 0, %s25
    %s28 = sadd.s32 1, %s19
    %s29 = scalar_select %p26, %s28, %s19
    %p30 = scmp.ge.s32.totalorder %s29, 2
    %s31 = scalar_select %p30, 0, %s29
    %s32 = ssub.s32 %s20, %s27
    %p33 = scmp.eq.s32.totalorder %s32, 0
    %s35 = sadd.s32 %s34, 1
    %s36 = scalar_select %p33, %s34, %s35
    %p39 = pneg %p33
    %p40 = scmp.eq.s32.totalorder %s12, 1
    %p41 = por %p39, %p40
    %p42 = scmp.ne.s32.totalorder %s34, %s37
    %p43 = scmp.eq.s32.totalorder %s12, 0
    %p44 = por %p42, %p43
    %p45 = scmp.ne.s32.totalorder %s34, %s37
    %p46 = scmp.eq.s32.totalorder %s17, 1
    %p47 = por %p45, %p46
    %p48 = scmp.ne.s32.totalorder %s37, %s38
    %p49 = scmp.eq.s32.totalorder %s17, 0
    %p50 = por %p48, %p49
    %p51 = scmp.ne.s32.totalorder %s37, %s38
    %p52 = scmp.eq.s32.totalorder %s18, 1
    %p53 = por %p51, %p52
    %p55 = scmp.ne.s32.totalorder %s38, %s54
    %p56 = scmp.eq.s32.totalorder %s18, 0
    %p57 = por %p55, %p56
    %s59 = sadd.s32 %s58, 1
    %p62 = scmp.eq.s32.totalorder %s12, 1
    %p63 = scmp.ne.s32.totalorder %s58, %s60
    %p64 = scmp.eq.s32.totalorder %s12, 0
    %p65 = por %p63, %p64
    %p66 = scmp.ne.s32.totalorder %s58, %s60
    %p67 = scmp.eq.s32.totalorder %s17, 1
    %p68 = por %p66, %p67
    %p69 = scmp.ne.s32.totalorder %s60, %s61
    %p70 = scmp.eq.s32.totalorder %s17, 0
    %p71 = por %p69, %p70
    %p72 = scmp.ne.s32.totalorder %s60, %s61
    %p73 = scmp.eq.s32.totalorder %s18, 1
    %p74 = por %p72, %p73
    %p76 = scmp.ne.s32.totalorder %s61, %s75
    %p77 = scmp.eq.s32.totalorder %s18, 0
    %p78 = por %p76, %p77
    %s79 = ssub.s32 %s20, %s27
    %p80 = scmp.eq.s32.totalorder %s79, 0
    %s82 = sadd.s32 %s81, 1
    %s83 = scalar_select %p80, %s81, %s82
    %p86 = pneg %p80
    %p87 = scmp.eq.s32.totalorder %s12, 1
    %p88 = por %p86, %p87
    %p89 = scmp.ne.s32.totalorder %s81, %s84
    %p90 = scmp.eq.s32.totalorder %s12, 0
    %p91 = por %p89, %p90
    %p92 = scmp.ne.s32.totalorder %s81, %s84
    %p93 = scmp.eq.s32.totalorder %s17, 1
    %p94 = por %p92, %p93
    %p95 = scmp.ne.s32.totalorder %s84, %s85
    %p96 = scmp.eq.s32.totalorder %s17, 0
    %p97 = por %p95, %p96
    %p98 = scmp.ne.s32.totalorder %s84, %s85
    %p99 = scmp.eq.s32.totalorder %s18, 1
    %p100 = por %p98, %p99
    %p102 = scmp.ne.s32.totalorder %s85, %s101
    %p103 = scmp.eq.s32.totalorder %s18, 0
    %p104 = por %p102, %p103
    %s105 = ssub.s32 %s19, %s31
    %s106 = ssub.s32 %s20, %s27
    %s107 = sor.u32 %s105, %s106
    %p108 = scmp.eq.s32.totalorder %s107, 0
    %s110 = sadd.s32 %s109, 1
    %s111 = scalar_select %p108, %s109, %s110
    %p114 = pneg %p108
    %p115 = scmp.eq.s32.totalorder %s12, 1
    %p116 = por %p114, %p115
    %p117 = scmp.ne.s32.totalorder %s109, %s112
    %p118 = scmp.eq.s32.totalorder %s12, 0
    %p119 = por %p117, %p118
    %p120 = scmp.ne.s32.totalorder %s109, %s112
    %p121 = scmp.eq.s32.totalorder %s17, 1
    %p122 = por %p120, %p121
    %p123 = scmp.ne.s32.totalorder %s112, %s113
    %p124 = scmp.eq.s32.totalorder %s17, 0
    %p125 = por %p123, %p124
    %p126 = scmp.ne.s32.totalorder %s112, %s113
    %p127 = scmp.eq.s32.totalorder %s18, 1
    %p128 = por %p126, %p127
    %p130 = scmp.ne.s32.totalorder %s113, %s129
    %p131 = scmp.eq.s32.totalorder %s18, 0
    %p132 = por %p130, %p131
    %s133 = ssub.s32 %s19, %s31
    %s134 = ssub.s32 %s20, %s27
    %s135 = sor.u32 %s133, %s134
    %p136 = scmp.eq.s32.totalorder %s135, 0
    %s138 = sadd.s32 %s137, 1
    %s139 = scalar_select %p136, %s137, %s138
    %p142 = pneg %p136
    %p143 = scmp.eq.s32.totalorder %s12, 1
    %p144 = por %p142, %p143
    %p145 = scmp.ne.s32.totalorder %s137, %s140
    %p146 = scmp.eq.s32.totalorder %s12, 0
    %p147 = por %p145, %p146
    %p148 = scmp.ne.s32.totalorder %s137, %s140
    %p149 = scmp.eq.s32.totalorder %s17, 1
    %p150 = por %p148, %p149
    %p151 = scmp.ne.s32.totalorder %s140, %s141
    %p152 = scmp.eq.s32.totalorder %s17, 0
    %p153 = por %p151, %p152
    %p154 = scmp.ne.s32.totalorder %s140, %s141
    %p155 = scmp.eq.s32.totalorder %s18, 1
    %p156 = por %p154, %p155
    %p158 = scmp.ne.s32.totalorder %s141, %s157
    %p159 = scmp.eq.s32.totalorder %s18, 0
    %p160 = por %p158, %p159
    %s161 = ssub.s32 %s19, %s31
    %s162 = ssub.s32 %s20, %s27
    %s163 = sor.u32 %s161, %s162
    %p164 = scmp.eq.s32.totalorder %s163, 0
    %s166 = sadd.s32 %s165, 1
    %s167 = scalar_select %p164, %s165, %s166
    %p170 = pneg %p164
    %p171 = scmp.eq.s32.totalorder %s12, 1
    %p172 = por %p170, %p171
    %p173 = scmp.ne.s32.totalorder %s165, %s168
    %p174 = scmp.eq.s32.totalorder %s12, 0
    %p175 = por %p173, %p174
    %p176 = scmp.ne.s32.totalorder %s165, %s168
    %p177 = scmp.eq.s32.totalorder %s17, 1
    %p178 = por %p176, %p177
    %p179 = scmp.ne.s32.totalorder %s168, %s169
    %p180 = scmp.eq.s32.totalorder %s17, 0
    %p181 = por %p179, %p180
    %p182 = scmp.ne.s32.totalorder %s168, %s169
    %p183 = scmp.eq.s32.totalorder %s18, 1
    %p184 = por %p182, %p183
    %p186 = scmp.ne.s32.totalorder %s169, %s185
    %p187 = scmp.eq.s32.totalorder %s18, 0
    %p188 = por %p186, %p187
    %p189 = scmp.le.s32.totalorder 1, %s12
    %p190 = scmp.lt.s32.totalorder %s12, 3
    %p191 = pnand %p189, %p190
    %p192 = pneg %p191
    // Predicated region
    $region9: #{upblock_forward.1} parent=5 // pred_check
      _
    $region10: #{upblock_forward.1} parent=5 // pred_check_branch
      %194 = sbr.rel (%p191) target = $region12
    $region11: #{upblock_forward.1} parent=5 // pred_region
      %s195 = ssub.s32 %s12, 1
      // Predicated region
      $region13: #{upblock_forward.1} parent=11 // pred_check
        %p196 = pneg %p50
      $region14: #{upblock_forward.1} parent=11 // pred_check_branch
        %198 = sbr.rel (%p196) target = $region16
      $region15: #{upblock_forward.1} parent=11 // pred_region
        %s199 = smul.u32 2, %s22
        %p200 = scmp.lt.s32.totalorder %s199, 1
        %s201 = scalar_select %p200, %s199, 1
        %s202 = smul.addr %s201, 4
        %s203 = scalar_lea.vmem %s1, %s202
        %s204 = smul.u32 2, %s22
      $region16: #{upblock_forward.1} parent=11 // pred_fallthru
        _
      // Predicated region
      $region17: #{upblock_forward.1} parent=11 // pred_check
        %p205 = pneg %p71
      $region18: #{upblock_forward.1} parent=11 // pred_check_branch
        %207 = sbr.rel (%p205) target = $region20
      $region19: #{upblock_forward.1} parent=11 // pred_region
        _
      $region20: #{upblock_forward.1} parent=11 // pred_fallthru
        _
      // Predicated region
      $region21: #{upblock_forward.1} parent=11 // pred_check
        %p208 = pneg %p97
      $region22: #{upblock_forward.1} parent=11 // pred_check_branch
        %210 = sbr.rel (%p208) target = $region24
      $region23: #{upblock_forward.1} parent=11 // pred_region
        %s211 = smul.u32 2, %s22
        %p212 = scmp.lt.s32.totalorder %s211, 1
        %s213 = scalar_select %p212, %s211, 1
        %s214 = smul.addr %s213, 8
        %s215 = scalar_lea.vmem %s3, %s214
        %s216 = smul.u32 2, %s22
      $region24: #{upblock_forward.1} parent=11 // pred_fallthru
        _
    $region12: #{upblock_forward.1} parent=5 // pred_fallthru
      _
    %p217 = scmp.lt.s32.totalorder %s12, 2
    // Predicated region
    $region25: #{upblock_forward.1} parent=5 // pred_check
      %p218 = pneg %p217
    $region26: #{upblock_forward.1} parent=5 // pred_check_branch
      %220 = sbr.rel (%p218) target = $region28
    $region27: #{upblock_forward.1} parent=5 // pred_region
      // Predicated region
      $region29: #{upblock_forward.1} parent=27 // pred_check
        %p221 = pneg %p119
      $region30: #{upblock_forward.1} parent=27 // pred_check_branch
        %223 = sbr.rel (%p221) target = $region32
      $region31: #{upblock_forward.1} parent=27 // pred_region
        %s224 = smul.u32 2, %s20
        %p225 = scmp.lt.s32.totalorder %s19, 1
        %s226 = scalar_select %p225, %s19, 1
        %p227 = scmp.lt.s32.totalorder %s224, 1
        %s228 = scalar_select %p227, %s224, 1
        %s229 = smul.addr %s226, 2
        %s230 = sadd.s32 %s228, %s229
        %s231 = smul.addr %s230, 8
        %s232 = scalar_lea.vmem %s4, %s231
        %s233 = smul.u32 2, %s20
      $region32: #{upblock_forward.1} parent=27 // pred_fallthru
        _
      // Predicated region
      $region33: #{upblock_forward.1} parent=27 // pred_check
        %p234 = pneg %p147
      $region34: #{upblock_forward.1} parent=27 // pred_check_branch
        %236 = sbr.rel (%p234) target = $region36
      $region35: #{upblock_forward.1} parent=27 // pred_region
        %s237 = smul.u32 2, %s20
        %p238 = scmp.lt.s32.totalorder %s19, 1
        %s239 = scalar_select %p238, %s19, 1
        %p240 = scmp.lt.s32.totalorder %s237, 1
        %s241 = scalar_select %p240, %s237, 1
        %s242 = smul.addr %s239, 2
        %s243 = sadd.s32 %s241, %s242
        %s244 = smul.addr %s243, 8
        %s245 = scalar_lea.vmem %s5, %s244
        %s246 = smul.u32 2, %s20
      $region36: #{upblock_forward.1} parent=27 // pred_fallthru
        _
    $region28: #{upblock_forward.1} parent=5 // pred_fallthru
      _
    %p247 = scmp.le.s32.totalorder 1, %s12
    %p248 = scmp.lt.s32.totalorder %s12, 3
    %p249 = pnand %p247, %p248
    %p250 = pneg %p249
    // Predicated region
    $region37: #{upblock_forward.1} parent=5 // pred_check
      _
    $region38: #{upblock_forward.1} parent=5 // pred_check_branch
      %252 = sbr.rel (%p249) target = $region40
    $region39: #{upblock_forward.1} parent=5 // pred_region
      %s253 = ssub.s32 %s12, 1
      %s254 = smul.u32 2, %s22
      %p255 = scmp.lt.s32.totalorder %s254, 1
      %s256 = scalar_select %p255, %s254, 1
      %s257 = smul.addr %s256, 4
      %s258 = scalar_lea.vmem %s1, %s257
      %p259 = pneg %p50
      %p260 = pneg %p47
      %p261 = pneg %p71
      %p262 = pneg %p68
      %s263 = smul.u32 2, %s22
      %p264 = scmp.lt.s32.totalorder %s263, 1
      %s265 = scalar_select %p264, %s263, 1
      %s266 = smul.addr %s265, 8
      %s267 = scalar_lea.vmem %s3, %s266
      %p268 = pneg %p97
      %p269 = pneg %p94
      %s270 = smul.u32 2, %s22
      %p271 = scmp.lt.s32.totalorder %s21, 1
      %s272 = scalar_select %p271, %s21, 1
      %p273 = scmp.lt.s32.totalorder %s270, 1
      %s274 = scalar_select %p273, %s270, 1
      %s275 = smul.addr %s272, 2
      %s276 = sadd.s32 %s274, %s275
      %s277 = smul.addr %s276, 8
      %s278 = scalar_lea.vmem %s4, %s277
      %p279 = pneg %p125
      %p280 = pneg %p122
      %s281 = smul.u32 2, %s22
      %p282 = scmp.lt.s32.totalorder %s21, 1
      %s283 = scalar_select %p282, %s21, 1
      %p284 = scmp.lt.s32.totalorder %s281, 1
      %s285 = scalar_select %p284, %s281, 1
      %s286 = smul.addr %s283, 2
      %s287 = sadd.s32 %s285, %s286
      %s288 = smul.addr %s287, 8
      %s289 = scalar_lea.vmem %s5, %s288
      %p290 = pneg %p153
      %p291 = pneg %p150
      %p292 = pneg %p181
      %p293 = pneg %p178
      %s294 = smul.u32 2, %s22
      %p295 = scmp.lt.s32.totalorder %s21, 1
      %s296 = scalar_select %p295, %s21, 1
      %p297 = scmp.lt.s32.totalorder %s294, 1
      %s298 = scalar_select %p297, %s294, 1
      %s299 = smul.addr %s298, 2
      %s300 = smul.addr %s296, 4
      %s301 = sadd.s32 %s299, %s300
      %s302 = smul.addr %s301, 4
      %s303 = scalar_lea.vmem %s6, %s302
      %s304 = smul.u32 2, %s22
      %p305 = scmp.lt.s32.totalorder %s304, 1
      %s306 = scalar_select %p305, %s304, 1
      %s307 = smul.addr %s306, 4
      %s308 = scalar_lea.vmem %s1, %s307
      %s309 = smul.u32 2, %s22
      %s310 = smul.u32 2, %s22
      %p311 = scmp.lt.s32.totalorder %s310, 1
      %s312 = scalar_select %p311, %s310, 1
      %s313 = smul.addr %s312, 8
      %s314 = scalar_lea.vmem %s3, %s313
      %s315 = smul.u32 2, %s22
      %s316 = smul.u32 2, %s22
      %p317 = scmp.lt.s32.totalorder %s21, 1
      %s318 = scalar_select %p317, %s21, 1
      %p319 = scmp.lt.s32.totalorder %s316, 1
      %s320 = scalar_select %p319, %s316, 1
      %s321 = smul.addr %s318, 2
      %s322 = sadd.s32 %s320, %s321
      %s323 = smul.addr %s322, 8
      %s324 = scalar_lea.vmem %s4, %s323
      %s325 = smul.u32 2, %s22
      %s326 = smul.u32 2, %s22
      %p327 = scmp.lt.s32.totalorder %s21, 1
      %s328 = scalar_select %p327, %s21, 1
      %p329 = scmp.lt.s32.totalorder %s326, 1
      %s330 = scalar_select %p329, %s326, 1
      %s331 = smul.addr %s328, 2
      %s332 = sadd.s32 %s330, %s331
      %s333 = smul.addr %s332, 8
      %s334 = scalar_lea.vmem %s5, %s333
      %s335 = smul.u32 2, %s22
      %s336 = smul.u32 2, %s22
      %p337 = scmp.lt.s32.totalorder %s21, 1
      %s338 = scalar_select %p337, %s21, 1
      %p339 = scmp.lt.s32.totalorder %s336, 1
      %s340 = scalar_select %p339, %s336, 1
      %s341 = smul.addr %s340, 2
      %s342 = smul.addr %s338, 4
      %s343 = sadd.s32 %s341, %s342
      %s344 = smul.addr %s343, 4
      %s345 = scalar_lea.vmem %s6, %s344
      %s346 = smul.u32 2, %s22
      %p348 = scmp.eq.s32.totalorder %s22, 0
      // Predicated region
      $region41: #{upblock_forward.1} parent=39 // pred_check
        %p349 = pneg %p348
      $region42: #{upblock_forward.1} parent=39 // pred_check_branch
        %351 = sbr.rel (%p349) target = $region44
      $region43: #{upblock_forward.1} parent=39 // pred_region
        %352 = vst [vmem:[#allocation2] sm:$0xf] 0
        %353 = vst [vmem:[#allocation2 + $0x10] sm:$0xf] 0
        %354 = vst [vmem:[#allocation2 + $0x20] sm:$0xf] 0
        %355 = vst [vmem:[#allocation2 + $0xc] sm:$0xf] 0
        %356 = vst [vmem:[#allocation2 + $0x1c] sm:$0xf] 0
        %357 = vst [vmem:[#allocation2 + $0x2c] sm:$0xf] 0
        %s358 = smul.u32 %s21, 6
        %s359 = smul.addr %s358, 4
        %s360 = scalar_lea.vmem %s0, %s359
        %s361 = scalar_lea.vmem [#allocation2], 4
        // Predicated region
        $region45: #{upblock_forward.1} parent=43 // pred_check
          _
        $region46: #{upblock_forward.1} parent=43 // pred_check_branch
          %363 = sbr.rel (0) target = $region48
        $region47: #{upblock_forward.1} parent=43 // pred_region
          // Predicated region
          $region60: #{upblock_forward.1} parent=47 // pred_check
            _
          $region61: #{upblock_forward.1} parent=47 // pred_check_branch
            %383 = sbr.rel (0) target = $region63
          $region62: #{upblock_forward.1} parent=47 // pred_region
            loop: start=0, step=1, limit=1
            $region64: #{upblock_forward.1} parent=62 // loop_pre_header
              _
            $region65: #{upblock_forward.1} parent=62 // loop_header
              %s385 = sphi 0, %s389
              %p386 = scmp.ge.s32.totalorder %s385, 1
              %s390 = sphi %s360, %s360
              %s391 = sphi %s361, %s361
            $region66: #{upblock_forward.1} parent=62 // loop_header_branch
              %388 = sbr.rel (%p386) target = $region70
            $region67: #{upblock_forward.1} parent=62 // loop_body
              %v392 = vld [vmem:[%s390] sm:$0xff]
              %393 = vst [vmem:[%s391] sm:$0xff] %v392
              %v394 = vld [vmem:[%s390 + $0x8] sm:$0xff]
              %395 = vst [vmem:[%s391 + $0x10] sm:$0xff] %v394
              %v396 = vld [vmem:[%s390 + $0x10] sm:$0xff]
              %397 = vst [vmem:[%s391 + $0x20] sm:$0xff] %v396
            $region68: #{upblock_forward.1} parent=62 // loop_footer
              %s389 = sadd.s32 1, %s385
            $region69: #{upblock_forward.1} parent=62 // loop_footer_branch
              %384 = sbr.rel target = $region65
            $region70: #{upblock_forward.1} parent=62 // loop_exit
              _
          $region63: #{upblock_forward.1} parent=47 // pred_fallthru
            _
          // Predicated region
          $region71: #{upblock_forward.1} parent=47 // pred_check
            _
          $region72: #{upblock_forward.1} parent=47 // pred_check_branch
            %399 = sbr.rel target = $region74
          $region73: #{upblock_forward.1} parent=47 // pred_region
            _
          $region74: #{upblock_forward.1} parent=47 // pred_fallthru
            _
        $region48: #{upblock_forward.1} parent=43 // pred_fallthru
          _
        // Predicated region
        $region49: #{upblock_forward.1} parent=43 // pred_check
          _
        $region50: #{upblock_forward.1} parent=43 // pred_check_branch
          %365 = sbr.rel target = $region52
        $region51: #{upblock_forward.1} parent=43 // pred_region
          %s367 = ssub.s32 256, 1
          loop: start=0, step=1, limit=1
          $region53: #{upblock_forward.1} parent=51 // loop_pre_header
            _
          $region54: #{upblock_forward.1} parent=51 // loop_header
            %s369 = sphi 0, %s373
            %p370 = scmp.ge.s32.totalorder %s369, 1
            %s374 = sphi %s360, %s360
            %s375 = sphi %s361, %s361
          $region55: #{upblock_forward.1} parent=51 // loop_header_branch
            %372 = sbr.rel (%p370) target = $region59
          $region56: #{upblock_forward.1} parent=51 // loop_body
            %v376 = vld [vmem:[%s374] sm:%s367]
            %377 = vst [vmem:[%s375] sm:%s367] %v376
            %v378 = vld [vmem:[%s374 + $0x8] sm:%s367]
            %379 = vst [vmem:[%s375 + $0x10] sm:%s367] %v378
            %v380 = vld [vmem:[%s374 + $0x10] sm:%s367]
            %381 = vst [vmem:[%s375 + $0x20] sm:%s367] %v380
          $region57: #{upblock_forward.1} parent=51 // loop_footer
            %s373 = sadd.s32 1, %s369
          $region58: #{upblock_forward.1} parent=51 // loop_footer_branch
            %368 = sbr.rel target = $region54
          $region59: #{upblock_forward.1} parent=51 // loop_exit
            _
        $region52: #{upblock_forward.1} parent=43 // pred_fallthru
          _
        // Predicated region
        $region75: #{upblock_forward.1} parent=43 // pred_check
          _
        $region76: #{upblock_forward.1} parent=43 // pred_check_branch
          %402 = sbr.rel (0) target = $region78
        $region77: #{upblock_forward.1} parent=43 // pred_region
          %403 = vsyncadd [#allocation3], 384
        $region78: #{upblock_forward.1} parent=43 // pred_fallthru
          _
        %s404 = smul.u32 4, 3
        %s405 = smul.u32 %s404, 2
        %s406 = sshll.u32 %s405, 4
        %407 = dma.done [#allocation3], %s406
      $region44: #{upblock_forward.1} parent=39 // pred_fallthru
        _
      %v408 = vld [vmem:[#allocation2] sm:$0xff]
      %v409 = vld [vmem:[#allocation2 + $0x8] sm:$0xf]
      %v410 = vld [vmem:[#allocation2 + $0x10] sm:$0xff]
      %v411 = vld [vmem:[#allocation2 + $0x18] sm:$0xf]
      %v412 = vld [vmem:[#allocation2 + $0x20] sm:$0xff]
      %v413 = vld [vmem:[#allocation2 + $0x28] sm:$0xf]
      %v414 = vld [vmem:[%s2] sm:$0x3]
      %416 = vst [vmem:[#allocation1] ss:$9 sm:$0xff] %v414
      %v417 = vld [vmem:[#allocation1] sm:$0xff]
      %v418 = vld [vmem:[#allocation1 + $0x9] sm:$0xff]
      %v419 = vpack.i.b16 %v417, %v417
      %v421 = vperm.slane %v419, 0
      %v422 = vpack.i.b16 %v418, %v418
      %v424 = vperm.slane %v422, 0
      %v425 = vunpack.c.l.bf16 %v408
      %v426 = vunpack.c.h.bf16 %v408
      %v427 = vunpack.c.l.bf16 %v409
      %v428 = vunpack.c.l.bf16 %v410
      %v429 = vunpack.c.h.bf16 %v410
      %v430 = vunpack.c.l.bf16 %v411
      %v431 = vunpack.c.l.bf16 %v412
      %v432 = vunpack.c.h.bf16 %v412
      %v433 = vunpack.c.l.bf16 %v413
      %v434 = vunpack.c.l.bf16 %v421
      %v435 = vunpack.c.l.bf16 %v424
      %438 = vrot.lane.b32.xlu0 %v434, 111
      %v439 = vpop.permute.xlu0 %438
      %440 = vrot.lane.b32.xlu0 %v435, 111
      %v441 = vpop.permute.xlu0 %440
      %vm442 = vcmask 908288
      %v443 = vsel %vm442, %v439, %v441
      %v447 = vmul.f32 %v425, %v439
      %v448 = vmul.f32 %v426, %v443
      %v449 = vmul.f32 %v427, %v441
      %v450 = vmul.f32 %v428, %v439
      %v451 = vmul.f32 %v429, %v443
      %v452 = vmul.f32 %v430, %v441
      %v453 = vmul.f32 %v431, %v439
      %v454 = vmul.f32 %v432, %v443
      %v455 = vmul.f32 %v433, %v441
      %v456 = vpack.c.bf16 %v450, %v447
      %v457 = vpack.c.bf16 %v451, %v448
      %v458 = vpack.c.bf16 %v452, %v449
      %v459 = vpack.c.bf16 %v453, %v453
      %v460 = vpack.c.bf16 %v454, %v454
      %v461 = vpack.c.bf16 %v455, %v455
      %v462 = vld [vmem:[%s308] sm:$0xf]
      %v463 = vld [vmem:[%s308 + $0x4] sm:$0xf]
      %v464 = vld [vmem:[#allocation2] sm:$0xff]
      %v465 = vld [vmem:[#allocation2 + $0x8] sm:$0xf]
      %v466 = vld [vmem:[#allocation2 + $0x10] sm:$0xff]
      %v467 = vld [vmem:[#allocation2 + $0x18] sm:$0xf]
      %v468 = vld [vmem:[#allocation2 + $0x20] sm:$0xff]
      %v469 = vld [vmem:[#allocation2 + $0x28] sm:$0xf]
      %s470 = scalar_lea.vmem %s308, 8
      %v471 = vld [vmem:[%s470] sm:$0xf]
      %v472 = vld [vmem:[%s470 + $0x4] sm:$0xf]
      %v475 = vunpack.c.l.b16 %v471
      %v476 = vunpack.c.l.b16 %v472
      %v477 = vpack.c.b16 %v476, %v475
      %v484 = vunpack.c.l.b16 %v464
      %v485 = vunpack.c.h.b16 %v464
      %v486 = vunpack.c.l.b16 %v465
      %v487 = vunpack.c.l.b16 %v466
      %v488 = vunpack.c.h.b16 %v466
      %v489 = vunpack.c.l.b16 %v467
      %v490 = vunpack.c.l.b16 %v468
      %v491 = vunpack.c.h.b16 %v468
      %v492 = vunpack.c.l.b16 %v469
      %v493 = vpack.c.b16 %v487, %v484
      %v494 = vpack.c.b16 %v488, %v485
      %v495 = vpack.c.b16 %v489, %v486
      %v496 = vpack.c.b16 %v490, %v490
      %v497 = vpack.c.b16 %v491, %v491
      %v498 = vpack.c.b16 %v492, %v492
      %499 = vrot.lane.b32.xlu0 %v493, 16
      %v500 = vpop.permute.xlu0 %499
      %501 = vrot.lane.b32.xlu0 %v494, 16
      %v502 = vpop.permute.xlu0 %501
      %503 = vrot.lane.b32.xlu0 %v495, 16
      %v504 = vpop.permute.xlu0 %503
      %505 = vrot.lane.b32.xlu0 %v496, 16
      %v506 = vpop.permute.xlu0 %505
      %507 = vrot.lane.b32.xlu0 %v497, 16
      %v508 = vpop.permute.xlu0 %507
      %509 = vrot.lane.b32.xlu0 %v498, 16
      %v510 = vpop.permute.xlu0 %509
      %vm511 = vcmask 130048
      %v512 = vsel %vm511, %v500, %v502
      %v513 = vsel %vm511, %v502, %v504
      %v514 = vsel %vm511, %v506, %v508
      %v515 = vsel %vm511, %v508, %v510
      %vm518 = vcmask 195584
      %v520 = vsel %vm518, %v477, 0
      %vm522 = vcmask 1043456
      %v524 = vsel %vm522, %v514, 0
      %v527 = vsel %vm522, %v515, 0
      %529 = vmatpush.bf16.msra.mxu0 0
      %530 = vmatpush.bf16.msra.mxu0 0
      %531 = vmatpush.bf16.msra.mxu0 0
      %532 = vmatpush.bf16.msra.mxu0 0
      %533 = vmatpush.bf16.msra.mxu0 0
      %534 = vmatpush.bf16.msra.mxu0 0
      %535 = vmatpush.bf16.msra.mxu0 %v524
      %536 = vmatpush.bf16.msra.mxu0 %v512
      %537 = vmatmul.bf16.gmra.mxu0 %v520
      %v538 = vpop.f32.mrf.mxu0
      %v539 = vadd.f32 0.0, %v538
      %v540 = vpop.f32.mrf.mxu0
      %v541 = vadd.f32 0.0, %v540
      %542 = vdwg.mxu0
      %543 = vmatpush.bf16.msra.mxu0 0
      %544 = vmatpush.bf16.msra.mxu0 0
      %545 = vmatpush.bf16.msra.mxu0 0
      %546 = vmatpush.bf16.msra.mxu0 0
      %547 = vmatpush.bf16.msra.mxu0 0
      %548 = vmatpush.bf16.msra.mxu0 0
      %549 = vmatpush.bf16.msra.mxu0 %v527
      %550 = vmatpush.bf16.msra.mxu0 %v513
      %551 = vmatmul.bf16.gmra.mxu0 %v520
      %v552 = vpop.f32.mrf.mxu0
      %v553 = vadd.f32 0.0, %v552
      %v554 = vpop.f32.mrf.mxu0
      %v555 = vadd.f32 0.0, %v554
      %556 = vdwg.mxu0
      %v559 = vunpack.c.l.b16 %v462
      %v560 = vunpack.c.l.b16 %v463
      %v561 = vpack.c.b16 %v560, %v559
      %568 = vrot.lane.b32.xlu0 %v456, 17
      %v569 = vpop.permute.xlu0 %568
      %570 = vrot.lane.b32.xlu0 %v457, 17
      %v571 = vpop.permute.xlu0 %570
      %572 = vrot.lane.b32.xlu0 %v458, 17
      %v573 = vpop.permute.xlu0 %572
      %574 = vrot.lane.b32.xlu0 %v459, 17
      %v575 = vpop.permute.xlu0 %574
      %576 = vrot.lane.b32.xlu0 %v460, 17
      %v577 = vpop.permute.xlu0 %576
      %578 = vrot.lane.b32.xlu0 %v461, 17
      %v579 = vpop.permute.xlu0 %578
      %vm580 = vcmask 138240
      %v581 = vsel %vm580, %v569, %v571
      %v582 = vsel %vm580, %v571, %v573
      %v583 = vsel %vm580, %v575, %v577
      %v584 = vsel %vm580, %v577, %v579
      %v588 = vsel %vm518, %v561, 0
      %v591 = vsel %vm522, %v583, 0
      %v594 = vsel %vm522, %v584, 0
      %596 = vmatpush.bf16.msra.mxu0 0
      %597 = vmatpush.bf16.msra.mxu0 0
      %598 = vmatpush.bf16.msra.mxu0 0
      %599 = vmatpush.bf16.msra.mxu0 0
      %600 = vmatpush.bf16.msra.mxu0 0
      %601 = vmatpush.bf16.msra.mxu0 0
      %602 = vmatpush.bf16.msra.mxu0 %v591
      %603 = vmatpush.bf16.msra.mxu0 %v581
      %604 = vmatmul.bf16.gmra.mxu0 %v588
      %v605 = vpop.f32.mrf.mxu0
      %v606 = vadd.f32 %v539, %v605
      %v607 = vpop.f32.mrf.mxu0
      %v608 = vadd.f32 %v541, %v607
      %609 = vdwg.mxu0
      %610 = vmatpush.bf16.msra.mxu0 0
      %611 = vmatpush.bf16.msra.mxu0 0
      %612 = vmatpush.bf16.msra.mxu0 0
      %613 = vmatpush.bf16.msra.mxu0 0
      %614 = vmatpush.bf16.msra.mxu0 0
      %615 = vmatpush.bf16.msra.mxu0 0
      %616 = vmatpush.bf16.msra.mxu0 %v594
      %617 = vmatpush.bf16.msra.mxu0 %v582
      %618 = vmatmul.bf16.gmra.mxu0 %v588
      %v619 = vpop.f32.mrf.mxu0
      %v620 = vadd.f32 %v553, %v619
      %v621 = vpop.f32.mrf.mxu0
      %v622 = vadd.f32 %v555, %v621
      %623 = vdwg.mxu0
      %s624 = scalar_lea.vmem %s2, 2
      %v625 = vld [vmem:[%s624] sm:$0x3]
      %627 = vst [vmem:[#allocation1] ss:$9 sm:$0xff] %v625
      %v628 = vld [vmem:[#allocation1] sm:$0xff]
      %v629 = vld [vmem:[#allocation1 + $0x9] sm:$0xff]
      %v630 = vpack.i.b16 %v628, %v628
      %v632 = vperm.slane %v630, 0
      %v633 = vpack.i.b16 %v629, %v629
      %v635 = vperm.slane %v633, 0
      %v636 = vunpack.c.l.bf16 %v464
      %v637 = vunpack.c.h.bf16 %v464
      %v638 = vunpack.c.l.bf16 %v465
      %v639 = vunpack.c.l.bf16 %v466
      %v640 = vunpack.c.h.bf16 %v466
      %v641 = vunpack.c.l.bf16 %v467
      %v642 = vunpack.c.l.bf16 %v468
      %v643 = vunpack.c.h.bf16 %v468
      %v644 = vunpack.c.l.bf16 %v469
      %v645 = vunpack.c.l.bf16 %v632
      %v646 = vunpack.c.l.bf16 %v635
      %649 = vrot.lane.b32.xlu0 %v645, 113
      %v650 = vpop.permute.xlu0 %649
      %651 = vrot.lane.b32.xlu0 %v646, 113
      %v652 = vpop.permute.xlu0 %651
      %vm653 = vcmask 924672
      %v654 = vsel %vm653, %v650, %v652
      %v658 = vmul.f32 %v636, %v650
      %v659 = vmul.f32 %v637, %v654
      %v660 = vmul.f32 %v638, %v652
      %v661 = vmul.f32 %v639, %v650
      %v662 = vmul.f32 %v640, %v654
      %v663 = vmul.f32 %v641, %v652
      %v664 = vmul.f32 %v642, %v650
      %v665 = vmul.f32 %v643, %v654
      %v666 = vmul.f32 %v644, %v652
      %v667 = vpack.c.bf16 %v661, %v658
      %v668 = vpack.c.bf16 %v662, %v659
      %v669 = vpack.c.bf16 %v663, %v660
      %v670 = vpack.c.bf16 %v664, %v664
      %v671 = vpack.c.bf16 %v665, %v665
      %v672 = vpack.c.bf16 %v666, %v666
      %s673 = scalar_lea.vmem %s308, 16
      %v674 = vld [vmem:[%s673] sm:$0xf]
      %v675 = vld [vmem:[%s673 + $0x4] sm:$0xf]
      %v678 = vunpack.c.l.b16 %v674
      %v679 = vunpack.c.l.b16 %v675
      %v680 = vpack.c.b16 %v679, %v678
      %687 = vrot.lane.b32.xlu0 %v667, 15
      %v688 = vpop.permute.xlu0 %687
      %689 = vrot.lane.b32.xlu0 %v668, 15
      %v690 = vpop.permute.xlu0 %689
      %691 = vrot.lane.b32.xlu0 %v669, 15
      %v692 = vpop.permute.xlu0 %691
      %693 = vrot.lane.b32.xlu0 %v670, 15
      %v694 = vpop.permute.xlu0 %693
      %695 = vrot.lane.b32.xlu0 %v671, 15
      %v696 = vpop.permute.xlu0 %695
      %697 = vrot.lane.b32.xlu0 %v672, 15
      %v698 = vpop.permute.xlu0 %697
      %vm699 = vcmask 121856
      %v700 = vsel %vm699, %v688, %v690
      %v701 = vsel %vm699, %v690, %v692
      %v702 = vsel %vm699, %v694, %v696
      %v703 = vsel %vm699, %v696, %v698
      %v707 = vsel %vm518, %v680, 0
      %v710 = vsel %vm522, %v702, 0
      %v713 = vsel %vm522, %v703, 0
      %715 = vmatpush.bf16.msra.mxu0 0
      %716 = vmatpush.bf16.msra.mxu0 0
      %717 = vmatpush.bf16.msra.mxu0 0
      %718 = vmatpush.bf16.msra.mxu0 0
      %719 = vmatpush.bf16.msra.mxu0 0
      %720 = vmatpush.bf16.msra.mxu0 0
      %721 = vmatpush.bf16.msra.mxu0 %v710
      %722 = vmatpush.bf16.msra.mxu0 %v700
      %723 = vmatmul.bf16.gmra.mxu0 %v707
      %v724 = vpop.f32.mrf.mxu0
      %v725 = vadd.f32 0.0, %v724
      %v726 = vpop.f32.mrf.mxu0
      %v727 = vadd.f32 0.0, %v726
      %728 = vdwg.mxu0
      %729 = vmatpush.bf16.msra.mxu0 0
      %730 = vmatpush.bf16.msra.mxu0 0
      %731 = vmatpush.bf16.msra.mxu0 0
      %732 = vmatpush.bf16.msra.mxu0 0
      %733 = vmatpush.bf16.msra.mxu0 0
      %734 = vmatpush.bf16.msra.mxu0 0
      %735 = vmatpush.bf16.msra.mxu0 %v713
      %736 = vmatpush.bf16.msra.mxu0 %v701
      %737 = vmatmul.bf16.gmra.mxu0 %v707
      %v738 = vpop.f32.mrf.mxu0
      %v739 = vadd.f32 0.0, %v738
      %v740 = vpop.f32.mrf.mxu0
      %v741 = vadd.f32 0.0, %v740
      %742 = vdwg.mxu0
      %v743 = vadd.f32 %v606, %v725
      %v744 = vadd.f32 %v620, %v739
      %v745 = vadd.f32 %v608, %v727
      %v746 = vadd.f32 %v622, %v741
      %v747 = vld [vmem:[#allocation2] sm:$0xff]
      %v748 = vld [vmem:[#allocation2 + $0x8] sm:$0xf]
      %v749 = vld [vmem:[#allocation2 + $0x10] sm:$0xff]
      %v750 = vld [vmem:[#allocation2 + $0x18] sm:$0xf]
      %v751 = vld [vmem:[#allocation2 + $0x20] sm:$0xff]
      %v752 = vld [vmem:[#allocation2 + $0x28] sm:$0xf]
      %v753 = vunpack.c.l.bf16 %v747
      %v754 = vunpack.c.h.bf16 %v747
      %v755 = vunpack.c.l.bf16 %v748
      %v756 = vunpack.c.l.bf16 %v749
      %v757 = vunpack.c.h.bf16 %v749
      %v758 = vunpack.c.l.bf16 %v750
      %v759 = vunpack.c.l.bf16 %v751
      %v760 = vunpack.c.h.bf16 %v751
      %v761 = vunpack.c.l.bf16 %v752
      %762 = vrot.lane.b32.xlu0 %v434, 127
      %v763 = vpop.permute.xlu0 %762
      %764 = vrot.lane.b32.xlu0 %v435, 127
      %v765 = vpop.permute.xlu0 %764
      %vm766 = vcmask 1039360
      %v767 = vsel %vm766, %v763, %v765
      %v771 = vmul.f32 %v753, %v763
      %v772 = vmul.f32 %v754, %v767
      %v773 = vmul.f32 %v755, %v765
      %v774 = vmul.f32 %v756, %v763
      %v775 = vmul.f32 %v757, %v767
      %v776 = vmul.f32 %v758, %v765
      %v777 = vmul.f32 %v759, %v763
      %v778 = vmul.f32 %v760, %v767
      %v779 = vmul.f32 %v761, %v765
      %v780 = vpack.c.bf16 %v774, %v771
      %v781 = vpack.c.bf16 %v775, %v772
      %v782 = vpack.c.bf16 %v776, %v773
      %v783 = vpack.c.bf16 %v777, %v777
      %v784 = vpack.c.bf16 %v778, %v778
      %v785 = vpack.c.bf16 %v779, %v779
      %s786 = scalar_lea.vmem %s308, 24
      %v787 = vld [vmem:[%s786] sm:$0xf]
      %v788 = vld [vmem:[%s786 + $0x4] sm:$0xf]
      %v791 = vunpack.c.l.b16 %v787
      %v792 = vunpack.c.l.b16 %v788
      %v793 = vpack.c.b16 %v792, %v791
      %800 = vrot.lane.b32.xlu0 %v780, 1
      %v801 = vpop.permute.xlu0 %800
      %802 = vrot.lane.b32.xlu0 %v781, 1
      %v803 = vpop.permute.xlu0 %802
      %804 = vrot.lane.b32.xlu0 %v782, 1
      %v805 = vpop.permute.xlu0 %804
      %806 = vrot.lane.b32.xlu0 %v783, 1
      %v807 = vpop.permute.xlu0 %806
      %808 = vrot.lane.b32.xlu0 %v784, 1
      %v809 = vpop.permute.xlu0 %808
      %810 = vrot.lane.b32.xlu0 %v785, 1
      %v811 = vpop.permute.xlu0 %810
      %vm812 = vcmask 7168
      %v813 = vsel %vm812, %v801, %v803
      %v814 = vsel %vm812, %v803, %v805
      %v815 = vsel %vm812, %v807, %v809
      %v816 = vsel %vm812, %v809, %v811
      %v820 = vsel %vm518, %v793, 0
      %v823 = vsel %vm522, %v815, 0
      %v826 = vsel %vm522, %v816, 0
      %828 = vmatpush.bf16.msra.mxu0 0
      %829 = vmatpush.bf16.msra.mxu0 0
      %830 = vmatpush.bf16.msra.mxu0 0
      %831 = vmatpush.bf16.msra.mxu0 0
      %832 = vmatpush.bf16.msra.mxu0 0
      %833 = vmatpush.bf16.msra.mxu0 0
      %834 = vmatpush.bf16.msra.mxu0 %v823
      %835 = vmatpush.bf16.msra.mxu0 %v813
      %836 = vmatmul.bf16.gmra.mxu0 %v820
      %v837 = vpop.f32.mrf.mxu0
      %v838 = vadd.f32 0.0, %v837
      %v839 = vpop.f32.mrf.mxu0
      %v840 = vadd.f32 0.0, %v839
      %841 = vdwg.mxu0
      %842 = vmatpush.bf16.msra.mxu0 0
      %843 = vmatpush.bf16.msra.mxu0 0
      %844 = vmatpush.bf16.msra.mxu0 0
      %845 = vmatpush.bf16.msra.mxu0 0
      %846 = vmatpush.bf16.msra.mxu0 0
      %847 = vmatpush.bf16.msra.mxu0 0
      %848 = vmatpush.bf16.msra.mxu0 %v826
      %849 = vmatpush.bf16.msra.mxu0 %v814
      %850 = vmatmul.bf16.gmra.mxu0 %v820
      %v851 = vpop.f32.mrf.mxu0
      %v852 = vadd.f32 0.0, %v851
      %v853 = vpop.f32.mrf.mxu0
      %v854 = vadd.f32 0.0, %v853
      %855 = vdwg.mxu0
      %v856 = vadd.f32 %v743, %v838
      %v857 = vadd.f32 %v744, %v852
      %v858 = vadd.f32 %v745, %v840
      %v859 = vadd.f32 %v746, %v854
      %v860 = vld [vmem:[#allocation2 + $0x4] sm:$0xff]
      %v861 = vld [vmem:[#allocation2 + $0x14] sm:$0xff]
      %v862 = vld [vmem:[#allocation2 + $0x24] sm:$0xff]
      %s863 = scalar_lea.vmem %s308, 32
      %v864 = vld [vmem:[%s863] sm:$0xf]
      %v865 = vld [vmem:[%s863 + $0x4] sm:$0xf]
      %v868 = vunpack.c.l.b16 %v864
      %v869 = vunpack.c.l.b16 %v865
      %v870 = vpack.c.b16 %v869, %v868
      %v874 = vunpack.c.l.b16 %v860
      %v875 = vunpack.c.h.b16 %v860
      %v876 = vunpack.c.l.b16 %v861
      %v877 = vunpack.c.h.b16 %v861
      %v878 = vunpack.c.l.b16 %v862
      %v879 = vunpack.c.h.b16 %v862
      %v880 = vpack.c.b16 %v876, %v874
      %v881 = vpack.c.b16 %v877, %v875
      %v882 = vpack.c.b16 %v878, %v878
      %v883 = vpack.c.b16 %v879, %v879
      %v887 = vsel %vm518, %v870, 0
      %v890 = vsel %vm522, %v882, 0
      %v893 = vsel %vm522, %v883, 0
      %895 = vmatpush.bf16.msra.mxu0 0
      %896 = vmatpush.bf16.msra.mxu0 0
      %897 = vmatpush.bf16.msra.mxu0 0
      %898 = vmatpush.bf16.msra.mxu0 0
      %899 = vmatpush.bf16.msra.mxu0 0
      %900 = vmatpush.bf16.msra.mxu0 0
      %901 = vmatpush.bf16.msra.mxu0 %v890
      %902 = vmatpush.bf16.msra.mxu0 %v880
      %903 = vmatmul.bf16.gmra.mxu0 %v887
      %v904 = vpop.f32.mrf.mxu0
      %v905 = vadd.f32 0.0, %v904
      %v906 = vpop.f32.mrf.mxu0
      %v907 = vadd.f32 0.0, %v906
      %908 = vdwg.mxu0
      %909 = vmatpush.bf16.msra.mxu0 0
      %910 = vmatpush.bf16.msra.mxu0 0
      %911 = vmatpush.bf16.msra.mxu0 0
      %912 = vmatpush.bf16.msra.mxu0 0
      %913 = vmatpush.bf16.msra.mxu0 0
      %914 = vmatpush.bf16.msra.mxu0 0
      %915 = vmatpush.bf16.msra.mxu0 %v893
      %916 = vmatpush.bf16.msra.mxu0 %v881
      %917 = vmatmul.bf16.gmra.mxu0 %v887
      %v918 = vpop.f32.mrf.mxu0
      %v919 = vadd.f32 0.0, %v918
      %v920 = vpop.f32.mrf.mxu0
      %v921 = vadd.f32 0.0, %v920
      %922 = vdwg.mxu0
      %v923 = vadd.f32 %v856, %v905
      %v924 = vadd.f32 %v857, %v919
      %v925 = vadd.f32 %v858, %v907
      %v926 = vadd.f32 %v859, %v921
      %v927 = vld [vmem:[#allocation2 + $0x4] sm:$0xff]
      %v928 = vld [vmem:[#allocation2 + $0xc] sm:$0xf]
      %v929 = vld [vmem:[#allocation2 + $0x14] sm:$0xff]
      %v930 = vld [vmem:[#allocation2 + $0x1c] sm:$0xf]
      %v931 = vld [vmem:[#allocation2 + $0x24] sm:$0xff]
      %v932 = vld [vmem:[#allocation2 + $0x2c] sm:$0xf]
      %v933 = vunpack.c.l.bf16 %v927
      %v934 = vunpack.c.h.bf16 %v927
      %v935 = vunpack.c.l.bf16 %v928
      %v936 = vunpack.c.l.bf16 %v929
      %v937 = vunpack.c.h.bf16 %v929
      %v938 = vunpack.c.l.bf16 %v930
      %v939 = vunpack.c.l.bf16 %v931
      %v940 = vunpack.c.h.bf16 %v931
      %v941 = vunpack.c.l.bf16 %v932
      %942 = vrot.lane.b32.xlu0 %v645, 1
      %v943 = vpop.permute.xlu0 %942
      %944 = vrot.lane.b32.xlu0 %v646, 1
      %v945 = vpop.permute.xlu0 %944
      %vm946 = vcmask 7168
      %v947 = vsel %vm946, %v943, %v945
      %v951 = vmul.f32 %v933, %v943
      %v952 = vmul.f32 %v934, %v947
      %v953 = vmul.f32 %v935, %v945
      %v954 = vmul.f32 %v936, %v943
      %v955 = vmul.f32 %v937, %v947
      %v956 = vmul.f32 %v938, %v945
      %v957 = vmul.f32 %v939, %v943
      %v958 = vmul.f32 %v940, %v947
      %v959 = vmul.f32 %v941, %v945
      %v960 = vpack.c.bf16 %v954, %v951
      %v961 = vpack.c.bf16 %v955, %v952
      %v962 = vpack.c.bf16 %v956, %v953
      %v963 = vpack.c.bf16 %v957, %v957
      %v964 = vpack.c.bf16 %v958, %v958
      %v965 = vpack.c.bf16 %v959, %v959
      %s966 = scalar_lea.vmem %s308, 40
      %v967 = vld [vmem:[%s966] sm:$0xf]
      %v968 = vld [vmem:[%s966 + $0x4] sm:$0xf]
      %v971 = vunpack.c.l.b16 %v967
      %v972 = vunpack.c.l.b16 %v968
      %v973 = vpack.c.b16 %v972, %v971
      %980 = vrot.lane.b32.xlu0 %v960, 127
      %v981 = vpop.permute.xlu0 %980
      %982 = vrot.lane.b32.xlu0 %v961, 127
      %v983 = vpop.permute.xlu0 %982
      %984 = vrot.lane.b32.xlu0 %v962, 127
      %v985 = vpop.permute.xlu0 %984
      %986 = vrot.lane.b32.xlu0 %v963, 127
      %v987 = vpop.permute.xlu0 %986
      %988 = vrot.lane.b32.xlu0 %v964, 127
      %v989 = vpop.permute.xlu0 %988
      %990 = vrot.lane.b32.xlu0 %v965, 127
      %v991 = vpop.permute.xlu0 %990
      %vm992 = vcmask 1039360
      %v993 = vsel %vm992, %v981, %v983
      %v994 = vsel %vm992, %v983, %v985
      %v995 = vsel %vm992, %v987, %v989
      %v996 = vsel %vm992, %v989, %v991
      %v1000 = vsel %vm518, %v973, 0
      %v1003 = vsel %vm522, %v995, 0
      %v1006 = vsel %vm522, %v996, 0
      %1008 = vmatpush.bf16.msra.mxu0 0
      %1009 = vmatpush.bf16.msra.mxu0 0
      %1010 = vmatpush.bf16.msra.mxu0 0
      %1011 = vmatpush.bf16.msra.mxu0 0
      %1012 = vmatpush.bf16.msra.mxu0 0
      %1013 = vmatpush.bf16.msra.mxu0 0
      %1014 = vmatpush.bf16.msra.mxu0 %v1003
      %1015 = vmatpush.bf16.msra.mxu0 %v993
      %1016 = vmatmul.bf16.gmra.mxu0 %v1000
      %v1017 = vpop.f32.mrf.mxu0
      %v1018 = vadd.f32 0.0, %v1017
      %v1019 = vpop.f32.mrf.mxu0
      %v1020 = vadd.f32 0.0, %v1019
      %1021 = vdwg.mxu0
      %1022 = vmatpush.bf16.msra.mxu0 0
      %1023 = vmatpush.bf16.msra.mxu0 0
      %1024 = vmatpush.bf16.msra.mxu0 0
      %1025 = vmatpush.bf16.msra.mxu0 0
      %1026 = vmatpush.bf16.msra.mxu0 0
      %1027 = vmatpush.bf16.msra.mxu0 0
      %1028 = vmatpush.bf16.msra.mxu0 %v1006
      %1029 = vmatpush.bf16.msra.mxu0 %v994
      %1030 = vmatmul.bf16.gmra.mxu0 %v1000
      %v1031 = vpop.f32.mrf.mxu0
      %v1032 = vadd.f32 0.0, %v1031
      %v1033 = vpop.f32.mrf.mxu0
      %v1034 = vadd.f32 0.0, %v1033
      %1035 = vdwg.mxu0
      %v1036 = vadd.f32 %v923, %v1018
      %v1037 = vadd.f32 %v924, %v1032
      %v1038 = vadd.f32 %v925, %v1020
      %v1039 = vadd.f32 %v926, %v1034
      %1040 = vrot.lane.b32.xlu0 %v434, 15
      %v1041 = vpop.permute.xlu0 %1040
      %1042 = vrot.lane.b32.xlu0 %v435, 15
      %v1043 = vpop.permute.xlu0 %1042
      %vm1044 = vcmask 121856
      %v1045 = vsel %vm1044, %v1041, %v1043
      %v1049 = vmul.f32 %v933, %v1041
      %v1050 = vmul.f32 %v934, %v1045
      %v1051 = vmul.f32 %v935, %v1043
      %v1052 = vmul.f32 %v936, %v1041
      %v1053 = vmul.f32 %v937, %v1045
      %v1054 = vmul.f32 %v938, %v1043
      %v1055 = vmul.f32 %v939, %v1041
      %v1056 = vmul.f32 %v940, %v1045
      %v1057 = vmul.f32 %v941, %v1043
      %v1058 = vpack.c.bf16 %v1052, %v1049
      %v1059 = vpack.c.bf16 %v1053, %v1050
      %v1060 = vpack.c.bf16 %v1054, %v1051
      %v1061 = vpack.c.bf16 %v1055, %v1055
      %v1062 = vpack.c.bf16 %v1056, %v1056
      %v1063 = vpack.c.bf16 %v1057, %v1057
      %s1064 = scalar_lea.vmem %s308, 48
      %v1065 = vld [vmem:[%s1064] sm:$0xf]
      %v1066 = vld [vmem:[%s1064 + $0x4] sm:$0xf]
      %v1069 = vunpack.c.l.b16 %v1065
      %v1070 = vunpack.c.l.b16 %v1066
      %v1071 = vpack.c.b16 %v1070, %v1069
      %1078 = vrot.lane.b32.xlu0 %v1058, 113
      %v1079 = vpop.permute.xlu0 %1078
      %1080 = vrot.lane.b32.xlu0 %v1059, 113
      %v1081 = vpop.permute.xlu0 %1080
      %1082 = vrot.lane.b32.xlu0 %v1060, 113
      %v1083 = vpop.permute.xlu0 %1082
      %1084 = vrot.lane.b32.xlu0 %v1061, 113
      %v1085 = vpop.permute.xlu0 %1084
      %1086 = vrot.lane.b32.xlu0 %v1062, 113
      %v1087 = vpop.permute.xlu0 %1086
      %1088 = vrot.lane.b32.xlu0 %v1063, 113
      %v1089 = vpop.permute.xlu0 %1088
      %vm1090 = vcmask 924672
      %v1091 = vsel %vm1090, %v1079, %v1081
      %v1092 = vsel %vm1090, %v1081, %v1083
      %v1093 = vsel %vm1090, %v1085, %v1087
      %v1094 = vsel %vm1090, %v1087, %v1089
      %v1098 = vsel %vm518, %v1071, 0
      %v1101 = vsel %vm522, %v1093, 0
      %v1104 = vsel %vm522, %v1094, 0
      %1106 = vmatpush.bf16.msra.mxu0 0
      %1107 = vmatpush.bf16.msra.mxu0 0
      %1108 = vmatpush.bf16.msra.mxu0 0
      %1109 = vmatpush.bf16.msra.mxu0 0
      %1110 = vmatpush.bf16.msra.mxu0 0
      %1111 = vmatpush.bf16.msra.mxu0 0
      %1112 = vmatpush.bf16.msra.mxu0 %v1101
      %1113 = vmatpush.bf16.msra.mxu0 %v1091
      %1114 = vmatmul.bf16.gmra.mxu0 %v1098
      %v1115 = vpop.f32.mrf.mxu0
      %v1116 = vadd.f32 0.0, %v1115
      %v1117 = vpop.f32.mrf.mxu0
      %v1118 = vadd.f32 0.0, %v1117
      %1119 = vdwg.mxu0
      %1120 = vmatpush.bf16.msra.mxu0 0
      %1121 = vmatpush.bf16.msra.mxu0 0
      %1122 = vmatpush.bf16.msra.mxu0 0
      %1123 = vmatpush.bf16.msra.mxu0 0
      %1124 = vmatpush.bf16.msra.mxu0 0
      %1125 = vmatpush.bf16.msra.mxu0 0
      %1126 = vmatpush.bf16.msra.mxu0 %v1104
      %1127 = vmatpush.bf16.msra.mxu0 %v1092
      %1128 = vmatmul.bf16.gmra.mxu0 %v1098
      %v1129 = vpop.f32.mrf.mxu0
      %v1130 = vadd.f32 0.0, %v1129
      %v1131 = vpop.f32.mrf.mxu0
      %v1132 = vadd.f32 0.0, %v1131
      %1133 = vdwg.mxu0
      %v1134 = vadd.f32 %v1036, %v1116
      %v1135 = vadd.f32 %v1037, %v1130
      %v1136 = vadd.f32 %v1038, %v1118
      %v1137 = vadd.f32 %v1039, %v1132
      %s1138 = scalar_lea.vmem %s308, 56
      %v1139 = vld [vmem:[%s1138] sm:$0xf]
      %v1140 = vld [vmem:[%s1138 + $0x4] sm:$0xf]
      %v1143 = vunpack.c.l.b16 %v1139
      %v1144 = vunpack.c.l.b16 %v1140
      %v1145 = vpack.c.b16 %v1144, %v1143
      %v1152 = vunpack.c.l.b16 %v927
      %v1153 = vunpack.c.h.b16 %v927
      %v1154 = vunpack.c.l.b16 %v928
      %v1155 = vunpack.c.l.b16 %v929
      %v1156 = vunpack.c.h.b16 %v929
      %v1157 = vunpack.c.l.b16 %v930
      %v1158 = vunpack.c.l.b16 %v931
      %v1159 = vunpack.c.h.b16 %v931
      %v1160 = vunpack.c.l.b16 %v932
      %v1161 = vpack.c.b16 %v1155, %v1152
      %v1162 = vpack.c.b16 %v1156, %v1153
      %v1163 = vpack.c.b16 %v1157, %v1154
      %v1164 = vpack.c.b16 %v1158, %v1158
      %v1165 = vpack.c.b16 %v1159, %v1159
      %v1166 = vpack.c.b16 %v1160, %v1160
      %1167 = vrot.lane.b32.xlu0 %v1161, 112
      %v1168 = vpop.permute.xlu0 %1167
      %1169 = vrot.lane.b32.xlu0 %v1162, 112
      %v1170 = vpop.permute.xlu0 %1169
      %1171 = vrot.lane.b32.xlu0 %v1163, 112
      %v1172 = vpop.permute.xlu0 %1171
      %1173 = vrot.lane.b32.xlu0 %v1164, 112
      %v1174 = vpop.permute.xlu0 %1173
      %1175 = vrot.lane.b32.xlu0 %v1165, 112
      %v1176 = vpop.permute.xlu0 %1175
      %1177 = vrot.lane.b32.xlu0 %v1166, 112
      %v1178 = vpop.permute.xlu0 %1177
      %vm1179 = vcmask 916480
      %v1180 = vsel %vm1179, %v1168, %v1170
      %v1181 = vsel %vm1179, %v1170, %v1172
      %v1182 = vsel %vm1179, %v1174, %v1176
      %v1183 = vsel %vm1179, %v1176, %v1178
      %v1187 = vsel %vm518, %v1145, 0
      %v1190 = vsel %vm522, %v1182, 0
      %v1193 = vsel %vm522, %v1183, 0
      %1195 = vmatpush.bf16.msra.mxu0 0
      %1196 = vmatpush.bf16.msra.mxu0 0
      %1197 = vmatpush.bf16.msra.mxu0 0
      %1198 = vmatpush.bf16.msra.mxu0 0
      %1199 = vmatpush.bf16.msra.mxu0 0
      %1200 = vmatpush.bf16.msra.mxu0 0
      %1201 = vmatpush.bf16.msra.mxu0 %v1190
      %1202 = vmatpush.bf16.msra.mxu0 %v1180
      %1203 = vmatmul.bf16.gmra.mxu0 %v1187
      %v1204 = vpop.f32.mrf.mxu0
      %v1205 = vadd.f32 0.0, %v1204
      %v1206 = vpop.f32.mrf.mxu0
      %v1207 = vadd.f32 0.0, %v1206
      %1208 = vdwg.mxu0
      %1209 = vmatpush.bf16.msra.mxu0 0
      %1210 = vmatpush.bf16.msra.mxu0 0
      %1211 = vmatpush.bf16.msra.mxu0 0
      %1212 = vmatpush.bf16.msra.mxu0 0
      %1213 = vmatpush.bf16.msra.mxu0 0
      %1214 = vmatpush.bf16.msra.mxu0 0
      %1215 = vmatpush.bf16.msra.mxu0 %v1193
      %1216 = vmatpush.bf16.msra.mxu0 %v1181
      %1217 = vmatmul.bf16.gmra.mxu0 %v1187
      %v1218 = vpop.f32.mrf.mxu0
      %v1219 = vadd.f32 0.0, %v1218
      %v1220 = vpop.f32.mrf.mxu0
      %v1221 = vadd.f32 0.0, %v1220
      %1222 = vdwg.mxu0
      %v1223 = vadd.f32 %v1134, %v1205
      %v1224 = vadd.f32 %v1135, %v1219
      %v1225 = vadd.f32 %v1136, %v1207
      %v1226 = vadd.f32 %v1137, %v1221
      %1227 = vrot.lane.b32.xlu0 %v645, 17
      %v1228 = vpop.permute.xlu0 %1227
      %1229 = vrot.lane.b32.xlu0 %v646, 17
      %v1230 = vpop.permute.xlu0 %1229
      %vm1231 = vcmask 138240
      %v1232 = vsel %vm1231, %v1228, %v1230
      %v1236 = vmul.f32 %v933, %v1228
      %v1237 = vmul.f32 %v934, %v1232
      %v1238 = vmul.f32 %v935, %v1230
      %v1239 = vmul.f32 %v936, %v1228
      %v1240 = vmul.f32 %v937, %v1232
      %v1241 = vmul.f32 %v938, %v1230
      %v1242 = vmul.f32 %v939, %v1228
      %v1243 = vmul.f32 %v940, %v1232
      %v1244 = vmul.f32 %v941, %v1230
      %v1245 = vpack.c.bf16 %v1239, %v1236
      %v1246 = vpack.c.bf16 %v1240, %v1237
      %v1247 = vpack.c.bf16 %v1241, %v1238
      %v1248 = vpack.c.bf16 %v1242, %v1242
      %v1249 = vpack.c.bf16 %v1243, %v1243
      %v1250 = vpack.c.bf16 %v1244, %v1244
      %s1251 = scalar_lea.vmem %s308, 64
      %v1252 = vld [vmem:[%s1251] sm:$0xf]
      %v1253 = vld [vmem:[%s1251 + $0x4] sm:$0xf]
      %v1256 = vunpack.c.l.b16 %v1252
      %v1257 = vunpack.c.l.b16 %v1253
      %v1258 = vpack.c.b16 %v1257, %v1256
      %1265 = vrot.lane.b32.xlu0 %v1245, 111
      %v1266 = vpop.permute.xlu0 %1265
      %1267 = vrot.lane.b32.xlu0 %v1246, 111
      %v1268 = vpop.permute.xlu0 %1267
      %1269 = vrot.lane.b32.xlu0 %v1247, 111
      %v1270 = vpop.permute.xlu0 %1269
      %1271 = vrot.lane.b32.xlu0 %v1248, 111
      %v1272 = vpop.permute.xlu0 %1271
      %1273 = vrot.lane.b32.xlu0 %v1249, 111
      %v1274 = vpop.permute.xlu0 %1273
      %1275 = vrot.lane.b32.xlu0 %v1250, 111
      %v1276 = vpop.permute.xlu0 %1275
      %vm1277 = vcmask 908288
      %v1278 = vsel %vm1277, %v1266, %v1268
      %v1279 = vsel %vm1277, %v1268, %v1270
      %v1280 = vsel %vm1277, %v1272, %v1274
      %v1281 = vsel %vm1277, %v1274, %v1276
      %v1285 = vsel %vm518, %v1258, 0
      %v1288 = vsel %vm522, %v1280, 0
      %v1291 = vsel %vm522, %v1281, 0
      %1293 = vmatpush.bf16.msra.mxu0 0
      %1294 = vmatpush.bf16.msra.mxu0 0
      %1295 = vmatpush.bf16.msra.mxu0 0
      %1296 = vmatpush.bf16.msra.mxu0 0
      %1297 = vmatpush.bf16.msra.mxu0 0
      %1298 = vmatpush.bf16.msra.mxu0 0
      %1299 = vmatpush.bf16.msra.mxu0 %v1288
      %1300 = vmatpush.bf16.msra.mxu0 %v1278
      %1301 = vmatmul.bf16.gmra.mxu0 %v1285
      %v1302 = vpop.f32.mrf.mxu0
      %v1303 = vadd.f32 0.0, %v1302
      %v1304 = vpop.f32.mrf.mxu0
      %v1305 = vadd.f32 0.0, %v1304
      %1306 = vdwg.mxu0
      %1307 = vmatpush.bf16.msra.mxu0 0
      %1308 = vmatpush.bf16.msra.mxu0 0
      %1309 = vmatpush.bf16.msra.mxu0 0
      %1310 = vmatpush.bf16.msra.mxu0 0
      %1311 = vmatpush.bf16.msra.mxu0 0
      %1312 = vmatpush.bf16.msra.mxu0 0
      %1313 = vmatpush.bf16.msra.mxu0 %v1291
      %1314 = vmatpush.bf16.msra.mxu0 %v1279
      %1315 = vmatmul.bf16.gmra.mxu0 %v1285
      %v1316 = vpop.f32.mrf.mxu0
      %v1317 = vadd.f32 0.0, %v1316
      %v1318 = vpop.f32.mrf.mxu0
      %v1319 = vadd.f32 0.0, %v1318
      %1320 = vdwg.mxu0
      %v1321 = vadd.f32 %v1223, %v1303
      %v1322 = vadd.f32 %v1224, %v1317
      %v1323 = vadd.f32 %v1225, %v1305
      %v1324 = vadd.f32 %v1226, %v1319
      %v1325 = vld [vmem:[%s314] sm:$0xff]
      %v1326 = vld [vmem:[%s314 + $0x8] sm:$0xff]
      %1328 = vset.pattern.permute.xlu0 0
      %1329 = vperm.xlu0 %1328, %v1325
      %v1330 = vpop.permute.xlu0 %1329
      %1333 = vset.pattern.permute.xlu0 0
      %1334 = vperm.xlu0 %1333, %v1326
      %v1335 = vpop.permute.xlu0 %1334
      %v1337 = vadd.f32 %v1321, %v1330
      %v1338 = vadd.f32 %v1322, %v1330
      %v1339 = vadd.f32 %v1323, %v1335
      %v1340 = vadd.f32 %v1324, %v1335
      %v1341 = vadd.f32 %v1337, %v1338
      %1342 = vadd.xlane.f32.xlu0 %v1341
      %v1343 = vpop.xlane.xlu0 %1342
      %v1344 = vadd.f32 %v1339, %v1340
      %1345 = vadd.xlane.f32.xlu0 %v1344
      %v1346 = vpop.xlane.xlu0 %1345
      %v1347 = vmul.f32 %v1337, %v1337
      %v1348 = vmul.f32 %v1338, %v1338
      %v1349 = vmul.f32 %v1339, %v1339
      %v1350 = vmul.f32 %v1340, %v1340
      %v1351 = vadd.f32 %v1347, %v1348
      %1352 = vadd.xlane.f32.xlu0 %v1351
      %v1353 = vpop.xlane.xlu0 %1352
      %v1354 = vadd.f32 %v1349, %v1350
      %1355 = vadd.xlane.f32.xlu0 %v1354
      %v1356 = vpop.xlane.xlu0 %1355
      %v1357 = vlaneseq
      %v1358 = vshrl.u32 %v1357, 7
      %v1359 = vadd.s32 %v1358, 8
      %vm1360 = vcmp.ge.s32.totalorder %v1358, 0
      %vm1361 = vcmp.ge.s32.totalorder %v1359, 0
      %vm1362 = vcmp.lt.s32.totalorder %v1358, 2
      %vm1363 = vcmp.lt.s32.totalorder %v1359, 2
      %vm1364 = vmand %vm1360, %vm1362
      %vm1365 = vmand %vm1361, %vm1363
      %v1366 = vsel %vm1364, %v1343, 0.0
      %v1367 = vsel %vm1365, %v1346, 0.0
      %v1368 = vadd.f32 %v1366, %v1367
      %v1369 = vrot.slane %v1368, 4
      %v1370 = vadd.f32 %v1368, %v1369
      %v1371 = vrot.slane %v1370, 2
      %v1372 = vadd.f32 %v1370, %v1371
      %v1373 = vrot.slane %v1372, 1
      %v1374 = vadd.f32 %v1372, %v1373
      %v1375 = vsel %vm1364, %v1353, 0.0
      %v1376 = vsel %vm1365, %v1356, 0.0
      %v1377 = vadd.f32 %v1375, %v1376
      %v1378 = vrot.slane %v1377, 4
      %v1379 = vadd.f32 %v1377, %v1378
      %v1380 = vrot.slane %v1379, 2
      %v1381 = vadd.f32 %v1379, %v1380
      %v1382 = vrot.slane %v1381, 1
      %v1383 = vadd.f32 %v1381, %v1382
      %v1384 = vmul.f32 %v1374, 0.001953125
      %v1385 = vmul.f32 %v1383, 0.001953125
      %v1386 = vmul.f32 %v1384, %v1384
      %v1387 = vsub.f32 %v1385, %v1386
      %v1388 = vmax.f32 %v1387, 0.0
      %v1389 = vsel %vm1364, %v1384, 0.0
      %v1390 = vsel %vm1365, %v1384, 0.0
      %v1391 = vsel %vm1364, %v1388, 0.0
      %v1392 = vsel %vm1365, %v1388, 0.0
      %vm1393 = vcmp.ge.s32.totalorder %v1358, 2
      %vm1394 = vcmp.ge.s32.totalorder %v1359, 2
      %vm1395 = vcmp.lt.s32.totalorder %v1358, 4
      %vm1396 = vcmp.lt.s32.totalorder %v1359, 4
      %vm1397 = vmand %vm1393, %vm1395
      %vm1398 = vmand %vm1394, %vm1396
      %v1399 = vsel %vm1397, %v1343, 0.0
      %v1400 = vsel %vm1398, %v1346, 0.0
      %v1401 = vadd.f32 %v1399, %v1400
      %v1402 = vrot.slane %v1401, 4
      %v1403 = vadd.f32 %v1401, %v1402
      %v1404 = vrot.slane %v1403, 2
      %v1405 = vadd.f32 %v1403, %v1404
      %v1406 = vrot.slane %v1405, 1
      %v1407 = vadd.f32 %v1405, %v1406
      %v1408 = vsel %vm1397, %v1353, 0.0
      %v1409 = vsel %vm1398, %v1356, 0.0
      %v1410 = vadd.f32 %v1408, %v1409
      %v1411 = vrot.slane %v1410, 4
      %v1412 = vadd.f32 %v1410, %v1411
      %v1413 = vrot.slane %v1412, 2
      %v1414 = vadd.f32 %v1412, %v1413
      %v1415 = vrot.slane %v1414, 1
      %v1416 = vadd.f32 %v1414, %v1415
      %v1417 = vmul.f32 %v1407, 0.001953125
      %v1418 = vmul.f32 %v1416, 0.001953125
      %v1419 = vmul.f32 %v1417, %v1417
      %v1420 = vsub.f32 %v1418, %v1419
      %v1421 = vmax.f32 %v1420, 0.0
      %v1422 = vsel %vm1397, %v1417, %v1389
      %v1423 = vsel %vm1398, %v1417, %v1390
      %v1424 = vsel %vm1397, %v1421, %v1391
      %v1425 = vsel %vm1398, %v1421, %v1392
      %vm1426 = vcmp.ge.s32.totalorder %v1358, 4
      %vm1427 = vcmp.ge.s32.totalorder %v1359, 4
      %vm1428 = vcmp.lt.s32.totalorder %v1358, 6
      %vm1429 = vcmp.lt.s32.totalorder %v1359, 6
      %vm1430 = vmand %vm1426, %vm1428
      %vm1431 = vmand %vm1427, %vm1429
      %v1432 = vsel %vm1430, %v1343, 0.0
      %v1433 = vsel %vm1431, %v1346, 0.0
      %v1434 = vadd.f32 %v1432, %v1433
      %v1435 = vrot.slane %v1434, 4
      %v1436 = vadd.f32 %v1434, %v1435
      %v1437 = vrot.slane %v1436, 2
      %v1438 = vadd.f32 %v1436, %v1437
      %v1439 = vrot.slane %v1438, 1
      %v1440 = vadd.f32 %v1438, %v1439
      %v1441 = vsel %vm1430, %v1353, 0.0
      %v1442 = vsel %vm1431, %v1356, 0.0
      %v1443 = vadd.f32 %v1441, %v1442
      %v1444 = vrot.slane %v1443, 4
      %v1445 = vadd.f32 %v1443, %v1444
      %v1446 = vrot.slane %v1445, 2
      %v1447 = vadd.f32 %v1445, %v1446
      %v1448 = vrot.slane %v1447, 1
      %v1449 = vadd.f32 %v1447, %v1448
      %v1450 = vmul.f32 %v1440, 0.001953125
      %v1451 = vmul.f32 %v1449, 0.001953125
      %v1452 = vmul.f32 %v1450, %v1450
      %v1453 = vsub.f32 %v1451, %v1452
      %v1454 = vmax.f32 %v1453, 0.0
      %v1455 = vsel %vm1430, %v1450, %v1422
      %v1456 = vsel %vm1431, %v1450, %v1423
      %v1457 = vsel %vm1430, %v1454, %v1424
      %v1458 = vsel %vm1431, %v1454, %v1425
      %vm1459 = vcmp.ge.s32.totalorder %v1358, 6
      %vm1460 = vcmp.ge.s32.totalorder %v1359, 6
      %vm1461 = vcmp.lt.s32.totalorder %v1358, 8
      %vm1462 = vcmp.lt.s32.totalorder %v1359, 8
      %vm1463 = vmand %vm1459, %vm1461
      %vm1464 = vmand %vm1460, %vm1462
      %v1465 = vsel %vm1463, %v1343, 0.0
      %v1466 = vsel %vm1464, %v1346, 0.0
      %v1467 = vadd.f32 %v1465, %v1466
      %v1468 = vrot.slane %v1467, 4
      %v1469 = vadd.f32 %v1467, %v1468
      %v1470 = vrot.slane %v1469, 2
      %v1471 = vadd.f32 %v1469, %v1470
      %v1472 = vrot.slane %v1471, 1
      %v1473 = vadd.f32 %v1471, %v1472
      %v1474 = vsel %vm1463, %v1353, 0.0
      %v1475 = vsel %vm1464, %v1356, 0.0
      %v1476 = vadd.f32 %v1474, %v1475
      %v1477 = vrot.slane %v1476, 4
      %v1478 = vadd.f32 %v1476, %v1477
      %v1479 = vrot.slane %v1478, 2
      %v1480 = vadd.f32 %v1478, %v1479
      %v1481 = vrot.slane %v1480, 1
      %v1482 = vadd.f32 %v1480, %v1481
      %v1483 = vmul.f32 %v1473, 0.001953125
      %v1484 = vmul.f32 %v1482, 0.001953125
      %v1485 = vmul.f32 %v1483, %v1483
      %v1486 = vsub.f32 %v1484, %v1485
      %v1487 = vmax.f32 %v1486, 0.0
      %v1488 = vsel %vm1463, %v1483, %v1455
      %v1489 = vsel %vm1464, %v1483, %v1456
      %v1490 = vsel %vm1463, %v1487, %v1457
      %v1491 = vsel %vm1464, %v1487, %v1458
      %vm1492 = vcmp.ge.s32.totalorder %v1358, 8
      %vm1493 = vcmp.ge.s32.totalorder %v1359, 8
      %vm1494 = vcmp.lt.s32.totalorder %v1358, 10
      %vm1495 = vcmp.lt.s32.totalorder %v1359, 10
      %vm1496 = vmand %vm1492, %vm1494
      %vm1497 = vmand %vm1493, %vm1495
      %v1498 = vsel %vm1496, %v1343, 0.0
      %v1499 = vsel %vm1497, %v1346, 0.0
      %v1500 = vadd.f32 %v1498, %v1499
      %v1501 = vrot.slane %v1500, 4
      %v1502 = vadd.f32 %v1500, %v1501
      %v1503 = vrot.slane %v1502, 2
      %v1504 = vadd.f32 %v1502, %v1503
      %v1505 = vrot.slane %v1504, 1
      %v1506 = vadd.f32 %v1504, %v1505
      %v1507 = vsel %vm1496, %v1353, 0.0
      %v1508 = vsel %vm1497, %v1356, 0.0
      %v1509 = vadd.f32 %v1507, %v1508
      %v1510 = vrot.slane %v1509, 4
      %v1511 = vadd.f32 %v1509, %v1510
      %v1512 = vrot.slane %v1511, 2
      %v1513 = vadd.f32 %v1511, %v1512
      %v1514 = vrot.slane %v1513, 1
      %v1515 = vadd.f32 %v1513, %v1514
      %v1516 = vmul.f32 %v1506, 0.001953125
      %v1517 = vmul.f32 %v1515, 0.001953125
      %v1518 = vmul.f32 %v1516, %v1516
      %v1519 = vsub.f32 %v1517, %v1518
      %v1520 = vmax.f32 %v1519, 0.0
      %v1521 = vsel %vm1496, %v1516, %v1488
      %v1522 = vsel %vm1497, %v1516, %v1489
      %v1523 = vsel %vm1496, %v1520, %v1490
      %v1524 = vsel %vm1497, %v1520, %v1491
      %vm1525 = vcmp.ge.s32.totalorder %v1358, 10
      %vm1526 = vcmp.ge.s32.totalorder %v1359, 10
      %vm1527 = vcmp.lt.s32.totalorder %v1358, 12
      %vm1528 = vcmp.lt.s32.totalorder %v1359, 12
      %vm1529 = vmand %vm1525, %vm1527
      %vm1530 = vmand %vm1526, %vm1528
      %v1531 = vsel %vm1529, %v1343, 0.0
      %v1532 = vsel %vm1530, %v1346, 0.0
      %v1533 = vadd.f32 %v1531, %v1532
      %v1534 = vrot.slane %v1533, 4
      %v1535 = vadd.f32 %v1533, %v1534
      %v1536 = vrot.slane %v1535, 2
      %v1537 = vadd.f32 %v1535, %v1536
      %v1538 = vrot.slane %v1537, 1
      %v1539 = vadd.f32 %v1537, %v1538
      %v1540 = vsel %vm1529, %v1353, 0.0
      %v1541 = vsel %vm1530, %v1356, 0.0
      %v1542 = vadd.f32 %v1540, %v1541
      %v1543 = vrot.slane %v1542, 4
      %v1544 = vadd.f32 %v1542, %v1543
      %v1545 = vrot.slane %v1544, 2
      %v1546 = vadd.f32 %v1544, %v1545
      %v1547 = vrot.slane %v1546, 1
      %v1548 = vadd.f32 %v1546, %v1547
      %v1549 = vmul.f32 %v1539, 0.001953125
      %v1550 = vmul.f32 %v1548, 0.001953125
      %v1551 = vmul.f32 %v1549, %v1549
      %v1552 = vsub.f32 %v1550, %v1551
      %v1553 = vmax.f32 %v1552, 0.0
      %v1554 = vsel %vm1529, %v1549, %v1521
      %v1555 = vsel %vm1530, %v1549, %v1522
      %v1556 = vsel %vm1529, %v1553, %v1523
      %v1557 = vsel %vm1530, %v1553, %v1524
      %vm1558 = vcmp.ge.s32.totalorder %v1358, 12
      %vm1559 = vcmp.ge.s32.totalorder %v1359, 12
      %vm1560 = vcmp.lt.s32.totalorder %v1358, 14
      %vm1561 = vcmp.lt.s32.totalorder %v1359, 14
      %vm1562 = vmand %vm1558, %vm1560
      %vm1563 = vmand %vm1559, %vm1561
      %v1564 = vsel %vm1562, %v1343, 0.0
      %v1565 = vsel %vm1563, %v1346, 0.0
      %v1566 = vadd.f32 %v1564, %v1565
      %v1567 = vrot.slane %v1566, 4
      %v1568 = vadd.f32 %v1566, %v1567
      %v1569 = vrot.slane %v1568, 2
      %v1570 = vadd.f32 %v1568, %v1569
      %v1571 = vrot.slane %v1570, 1
      %v1572 = vadd.f32 %v1570, %v1571
      %v1573 = vsel %vm1562, %v1353, 0.0
      %v1574 = vsel %vm1563, %v1356, 0.0
      %v1575 = vadd.f32 %v1573, %v1574
      %v1576 = vrot.slane %v1575, 4
      %v1577 = vadd.f32 %v1575, %v1576
      %v1578 = vrot.slane %v1577, 2
      %v1579 = vadd.f32 %v1577, %v1578
      %v1580 = vrot.slane %v1579, 1
      %v1581 = vadd.f32 %v1579, %v1580
      %v1582 = vmul.f32 %v1572, 0.001953125
      %v1583 = vmul.f32 %v1581, 0.001953125
      %v1584 = vmul.f32 %v1582, %v1582
      %v1585 = vsub.f32 %v1583, %v1584
      %v1586 = vmax.f32 %v1585, 0.0
      %v1587 = vsel %vm1562, %v1582, %v1554
      %v1588 = vsel %vm1563, %v1582, %v1555
      %v1589 = vsel %vm1562, %v1586, %v1556
      %v1590 = vsel %vm1563, %v1586, %v1557
      %vm1591 = vcmp.ge.s32.totalorder %v1358, 14
      %vm1592 = vcmp.ge.s32.totalorder %v1359, 14
      %vm1593 = vcmp.lt.s32.totalorder %v1358, 16
      %vm1594 = vcmp.lt.s32.totalorder %v1359, 16
      %vm1595 = vmand %vm1591, %vm1593
      %vm1596 = vmand %vm1592, %vm1594
      %v1597 = vsel %vm1595, %v1343, 0.0
      %v1598 = vsel %vm1596, %v1346, 0.0
      %v1599 = vadd.f32 %v1597, %v1598
      %v1600 = vrot.slane %v1599, 4
      %v1601 = vadd.f32 %v1599, %v1600
      %v1602 = vrot.slane %v1601, 2
      %v1603 = vadd.f32 %v1601, %v1602
      %v1604 = vrot.slane %v1603, 1
      %v1605 = vadd.f32 %v1603, %v1604
      %v1606 = vsel %vm1595, %v1353, 0.0
      %v1607 = vsel %vm1596, %v1356, 0.0
      %v1608 = vadd.f32 %v1606, %v1607
      %v1609 = vrot.slane %v1608, 4
      %v1610 = vadd.f32 %v1608, %v1609
      %v1611 = vrot.slane %v1610, 2
      %v1612 = vadd.f32 %v1610, %v1611
      %v1613 = vrot.slane %v1612, 1
      %v1614 = vadd.f32 %v1612, %v1613
      %v1615 = vmul.f32 %v1605, 0.001953125
      %v1616 = vmul.f32 %v1614, 0.001953125
      %v1617 = vmul.f32 %v1615, %v1615
      %v1618 = vsub.f32 %v1616, %v1617
      %v1619 = vmax.f32 %v1618, 0.0
      %v1620 = vsel %vm1595, %v1615, %v1587
      %v1621 = vsel %vm1596, %v1615, %v1588
      %v1622 = vsel %vm1595, %v1619, %v1589
      %v1623 = vsel %vm1596, %v1619, %v1590
      %v1624 = vadd.f32 %v1622, 1e-05
      %v1625 = vadd.f32 %v1623, 1e-05
      %v1626 = vrsqrt.pop %v1624
      %v1627 = vmul.f32 %v1626, %v1624
      %v1628 = vmul.f32 %v1627, %v1626
      %v1629 = vmul.f32 0.5, %v1628
      %v1630 = vsub.f32 1.5, %v1629
      %v1631 = vmul.f32 %v1626, %v1630
      %vm1632 = vweird.f32 %v1624
      %vm1633 = vweird.f32 %v1626
      %vm1634 = vmor %vm1632, %vm1633
      %v1635 = vsel %vm1634, %v1626, %v1631
      %v1636 = vrsqrt.pop %v1625
      %v1637 = vmul.f32 %v1636, %v1625
      %v1638 = vmul.f32 %v1637, %v1636
      %v1639 = vmul.f32 0.5, %v1638
      %v1640 = vsub.f32 1.5, %v1639
      %v1641 = vmul.f32 %v1636, %v1640
      %vm1642 = vweird.f32 %v1625
      %vm1643 = vweird.f32 %v1636
      %vm1644 = vmor %vm1642, %vm1643
      %v1645 = vsel %vm1644, %v1636, %v1641
      %v1646 = vld [vmem:[%s324] sm:$0xff]
      %v1647 = vld [vmem:[%s324 + $0x8] sm:$0xff]
      %v1648 = vmul.f32 %v1635, %v1646
      %v1649 = vmul.f32 %v1645, %v1647
      %v1650 = vld [vmem:[%s334] sm:$0xff]
      %v1651 = vld [vmem:[%s334 + $0x8] sm:$0xff]
      %v1652 = vmul.f32 %v1620, %v1648
      %v1653 = vmul.f32 %v1621, %v1649
      %v1654 = vsub.f32 %v1650, %v1652
      %v1655 = vsub.f32 %v1651, %v1653
      %1657 = vset.pattern.permute.xlu0 0
      %1658 = vperm.xlu0 %1657, %v1648
      %v1659 = vpop.permute.xlu0 %1658
      %1662 = vset.pattern.permute.xlu0 0
      %1663 = vperm.xlu0 %1662, %v1649
      %v1664 = vpop.permute.xlu0 %1663
      %v1666 = vmul.f32 %v1337, %v1659
      %v1667 = vmul.f32 %v1338, %v1659
      %v1668 = vmul.f32 %v1339, %v1664
      %v1669 = vmul.f32 %v1340, %v1664
      %1671 = vset.pattern.permute.xlu0 0
      %1672 = vperm.xlu0 %1671, %v1654
      %v1673 = vpop.permute.xlu0 %1672
      %1676 = vset.pattern.permute.xlu0 0
      %1677 = vperm.xlu0 %1676, %v1655
      %v1678 = vpop.permute.xlu0 %1677
      %v1680 = vadd.f32 %v1666, %v1673
      %v1681 = vadd.f32 %v1667, %v1673
      %v1682 = vadd.f32 %v1668, %v1678
      %v1683 = vadd.f32 %v1669, %v1678
      %v1684 = vmul.f32 %v1680, 0.5
      %v1685 = vmul.f32 %v1681, 0.5
      %v1686 = vmul.f32 %v1682, 0.5
      %v1687 = vmul.f32 %v1683, 0.5
      %v1688 = vmul.f32 %v1680, 0.70710677
      %v1689 = vmul.f32 %v1681, 0.70710677
      %v1690 = vmul.f32 %v1682, 0.70710677
      %v1691 = vmul.f32 %v1683, 0.70710677
      %v1692 = vmul.f32 %v1688, %v1688
      %v1693 = vmin.f32 16.0, %v1692
      %v1694 = vmul.f32 %v1693, 2.1237322e-06
      %v1695 = vadd.f32 %v1694, 0.00028619796
      %v1696 = vmul.f32 %v1693, %v1695
      %v1697 = vadd.f32 %v1696, 0.0036580483
      %v1698 = vmul.f32 %v1693, %v1697
      %v1699 = vadd.f32 %v1698, 0.05243302
      %v1700 = vmul.f32 %v1693, %v1699
      %v1701 = vadd.f32 %v1700, 0.18741608
      %v1702 = vmul.f32 %v1693, %v1701
      %v1703 = vadd.f32 %v1702, 1.1283791
      %v1704 = vmul.f32 %v1688, %v1703
      %v1705 = vmul.f32 %v1693, 3.8918573e-05
      %v1706 = vadd.f32 %v1705, 0.001143296
      %v1707 = vmul.f32 %v1693, %v1706
      %v1708 = vadd.f32 %v1707, 0.014752088
      %v1709 = vmul.f32 %v1693, %v1708
      %v1710 = vadd.f32 %v1709, 0.112945676
      %v1711 = vmul.f32 %v1693, %v1710
      %v1712 = vadd.f32 %v1711, 0.4994258
      %v1713 = vmul.f32 %v1693, %v1712
      %v1714 = vadd.f32 %v1713, 1.0
      %v1715 = vrcp.pop %v1714
      %v1716 = vmul.f32 %v1714, %v1715
      %v1717 = vsub.f32 1.0, %v1716
      %v1718 = vmul.f32 %v1715, %v1717
      %v1719 = vadd.f32 %v1715, %v1718
      %vm1720 = vweird.f32 %v1714
      %vm1721 = vweird.f32 %v1715
      %vm1722 = vmor %vm1720, %vm1721
      %v1723 = vsel %vm1722, %v1715, %v1719
      %v1724 = vand.u32 2147483647, %v1714
      %vm1725 = vcmp.eq.f32.partialorder %v1724, 8.507059e+37
      %v1726 = vand.u32 %v1714, 2147483648
      %v1727 = vor.u32 1.1754944e-38, %v1726
      %v1728 = vsel %vm1725, %v1727, %v1723
      %v1729 = vmul.f32 %v1704, %v1728
      %v1730 = vmin.f32 %v1729, 1.0
      %v1731 = vmax.f32 %v1730, -1.0
      %v1732 = vmul.f32 %v1689, %v1689
      %v1733 = vmin.f32 16.0, %v1732
      %v1734 = vmul.f32 %v1733, 2.1237322e-06
      %v1735 = vadd.f32 %v1734, 0.00028619796
      %v1736 = vmul.f32 %v1733, %v1735
      %v1737 = vadd.f32 %v1736, 0.0036580483
      %v1738 = vmul.f32 %v1733, %v1737
      %v1739 = vadd.f32 %v1738, 0.05243302
      %v1740 = vmul.f32 %v1733, %v1739
      %v1741 = vadd.f32 %v1740, 0.18741608
      %v1742 = vmul.f32 %v1733, %v1741
      %v1743 = vadd.f32 %v1742, 1.1283791
      %v1744 = vmul.f32 %v1689, %v1743
      %v1745 = vmul.f32 %v1733, 3.8918573e-05
      %v1746 = vadd.f32 %v1745, 0.001143296
      %v1747 = vmul.f32 %v1733, %v1746
      %v1748 = vadd.f32 %v1747, 0.014752088
      %v1749 = vmul.f32 %v1733, %v1748
      %v1750 = vadd.f32 %v1749, 0.112945676
      %v1751 = vmul.f32 %v1733, %v1750
      %v1752 = vadd.f32 %v1751, 0.4994258
      %v1753 = vmul.f32 %v1733, %v1752
      %v1754 = vadd.f32 %v1753, 1.0
      %v1755 = vrcp.pop %v1754
      %v1756 = vmul.f32 %v1754, %v1755
      %v1757 = vsub.f32 1.0, %v1756
      %v1758 = vmul.f32 %v1755, %v1757
      %v1759 = vadd.f32 %v1755, %v1758
      %vm1760 = vweird.f32 %v1754
      %vm1761 = vweird.f32 %v1755
      %vm1762 = vmor %vm1760, %vm1761
      %v1763 = vsel %vm1762, %v1755, %v1759
      %v1764 = vand.u32 2147483647, %v1754
      %vm1765 = vcmp.eq.f32.partialorder %v1764, 8.507059e+37
      %v1766 = vand.u32 %v1754, 2147483648
      %v1767 = vor.u32 1.1754944e-38, %v1766
      %v1768 = vsel %vm1765, %v1767, %v1763
      %v1769 = vmul.f32 %v1744, %v1768
      %v1770 = vmin.f32 %v1769, 1.0
      %v1771 = vmax.f32 %v1770, -1.0
      %v1772 = vmul.f32 %v1690, %v1690
      %v1773 = vmin.f32 16.0, %v1772
      %v1774 = vmul.f32 %v1773, 2.1237322e-06
      %v1775 = vadd.f32 %v1774, 0.00028619796
      %v1776 = vmul.f32 %v1773, %v1775
      %v1777 = vadd.f32 %v1776, 0.0036580483
      %v1778 = vmul.f32 %v1773, %v1777
      %v1779 = vadd.f32 %v1778, 0.05243302
      %v1780 = vmul.f32 %v1773, %v1779
      %v1781 = vadd.f32 %v1780, 0.18741608
      %v1782 = vmul.f32 %v1773, %v1781
      %v1783 = vadd.f32 %v1782, 1.1283791
      %v1784 = vmul.f32 %v1690, %v1783
      %v1785 = vmul.f32 %v1773, 3.8918573e-05
      %v1786 = vadd.f32 %v1785, 0.001143296
      %v1787 = vmul.f32 %v1773, %v1786
      %v1788 = vadd.f32 %v1787, 0.014752088
      %v1789 = vmul.f32 %v1773, %v1788
      %v1790 = vadd.f32 %v1789, 0.112945676
      %v1791 = vmul.f32 %v1773, %v1790
      %v1792 = vadd.f32 %v1791, 0.4994258
      %v1793 = vmul.f32 %v1773, %v1792
      %v1794 = vadd.f32 %v1793, 1.0
      %v1795 = vrcp.pop %v1794
      %v1796 = vmul.f32 %v1794, %v1795
      %v1797 = vsub.f32 1.0, %v1796
      %v1798 = vmul.f32 %v1795, %v1797
      %v1799 = vadd.f32 %v1795, %v1798
      %vm1800 = vweird.f32 %v1794
      %vm1801 = vweird.f32 %v1795
      %vm1802 = vmor %vm1800, %vm1801
      %v1803 = vsel %vm1802, %v1795, %v1799
      %v1804 = vand.u32 2147483647, %v1794
      %vm1805 = vcmp.eq.f32.partialorder %v1804, 8.507059e+37
      %v1806 = vand.u32 %v1794, 2147483648
      %v1807 = vor.u32 1.1754944e-38, %v1806
      %v1808 = vsel %vm1805, %v1807, %v1803
      %v1809 = vmul.f32 %v1784, %v1808
      %v1810 = vmin.f32 %v1809, 1.0
      %v1811 = vmax.f32 %v1810, -1.0
      %v1812 = vmul.f32 %v1691, %v1691
      %v1813 = vmin.f32 16.0, %v1812
      %v1814 = vmul.f32 %v1813, 2.1237322e-06
      %v1815 = vadd.f32 %v1814, 0.00028619796
      %v1816 = vmul.f32 %v1813, %v1815
      %v1817 = vadd.f32 %v1816, 0.0036580483
      %v1818 = vmul.f32 %v1813, %v1817
      %v1819 = vadd.f32 %v1818, 0.05243302
      %v1820 = vmul.f32 %v1813, %v1819
      %v1821 = vadd.f32 %v1820, 0.18741608
      %v1822 = vmul.f32 %v1813, %v1821
      %v1823 = vadd.f32 %v1822, 1.1283791
      %v1824 = vmul.f32 %v1691, %v1823
      %v1825 = vmul.f32 %v1813, 3.8918573e-05
      %v1826 = vadd.f32 %v1825, 0.001143296
      %v1827 = vmul.f32 %v1813, %v1826
      %v1828 = vadd.f32 %v1827, 0.014752088
      %v1829 = vmul.f32 %v1813, %v1828
      %v1830 = vadd.f32 %v1829, 0.112945676
      %v1831 = vmul.f32 %v1813, %v1830
      %v1832 = vadd.f32 %v1831, 0.4994258
      %v1833 = vmul.f32 %v1813, %v1832
      %v1834 = vadd.f32 %v1833, 1.0
      %v1835 = vrcp.pop %v1834
      %v1836 = vmul.f32 %v1834, %v1835
      %v1837 = vsub.f32 1.0, %v1836
      %v1838 = vmul.f32 %v1835, %v1837
      %v1839 = vadd.f32 %v1835, %v1838
      %vm1840 = vweird.f32 %v1834
      %vm1841 = vweird.f32 %v1835
      %vm1842 = vmor %vm1840, %vm1841
      %v1843 = vsel %vm1842, %v1835, %v1839
      %v1844 = vand.u32 2147483647, %v1834
      %vm1845 = vcmp.eq.f32.partialorder %v1844, 8.507059e+37
      %v1846 = vand.u32 %v1834, 2147483648
      %v1847 = vor.u32 1.1754944e-38, %v1846
      %v1848 = vsel %vm1845, %v1847, %v1843
      %v1849 = vmul.f32 %v1824, %v1848
      %v1850 = vmin.f32 %v1849, 1.0
      %v1851 = vmax.f32 %v1850, -1.0
      %v1852 = vadd.f32 %v1731, 1.0
      %v1853 = vadd.f32 %v1771, 1.0
      %v1854 = vadd.f32 %v1811, 1.0
      %v1855 = vadd.f32 %v1851, 1.0
      %v1856 = vmul.f32 %v1684, %v1852
      %v1857 = vmul.f32 %v1685, %v1853
      %v1858 = vmul.f32 %v1686, %v1854
      %v1859 = vmul.f32 %v1687, %v1855
      %v1860 = vpack.c.bf16 %v1857, %v1856
      %v1861 = vpack.c.bf16 %v1859, %v1858
      %1862 = vst [vmem:[%s345] sm:$0xff] %v1860
      %1863 = vst [vmem:[%s345 + $0x8] sm:$0xff] %v1861
      %s1864 = smul.u32 2, %s22
      %p1865 = scmp.lt.s32.totalorder %s21, 1
      %s1866 = scalar_select %p1865, %s21, 1
      %p1867 = scmp.lt.s32.totalorder %s1864, 1
      %s1868 = scalar_select %p1867, %s1864, 1
      %s1869 = smul.addr %s1868, 2
      %s1870 = smul.addr %s1866, 4
      %s1871 = sadd.s32 %s1869, %s1870
      %s1872 = smul.addr %s1871, 4
      %s1873 = scalar_lea.vmem %s6, %s1872
      // Predicated region
      $region79: #{upblock_forward.1} parent=39 // pred_check
        %p1874 = pneg %p178
      $region80: #{upblock_forward.1} parent=39 // pred_check_branch
        %1876 = sbr.rel (%p1874) target = $region82
      $region81: #{upblock_forward.1} parent=39 // pred_region
        %s1877 = smul.u32 2, %s22
      $region82: #{upblock_forward.1} parent=39 // pred_fallthru
        _
    $region40: #{upblock_forward.1} parent=5 // pred_fallthru
      _
    %p1878 = scmp.le.s32.totalorder 2, %s12
    // Predicated region
    $region83: #{upblock_forward.1} parent=5 // pred_check
      %p1879 = pneg %p1878
    $region84: #{upblock_forward.1} parent=5 // pred_check_branch
      %1881 = sbr.rel (%p1879) target = $region86
    $region85: #{upblock_forward.1} parent=5 // pred_region
      %s1882 = ssub.s32 %s12, 2
      // Predicated region
      $region87: #{upblock_forward.1} parent=85 // pred_check
        %p1883 = pneg %p184
      $region88: #{upblock_forward.1} parent=85 // pred_check_branch
        %1885 = sbr.rel (%p1883) target = $region90
      $region89: #{upblock_forward.1} parent=85 // pred_region
        %s1886 = smul.u32 2, %s24
        %p1887 = scmp.lt.s32.totalorder %s23, 1
        %s1888 = scalar_select %p1887, %s23, 1
        %p1889 = scmp.lt.s32.totalorder %s1886, 1
        %s1890 = scalar_select %p1889, %s1886, 1
        %s1891 = smul.addr %s1890, 2
        %s1892 = smul.addr %s1888, 4
        %s1893 = sadd.s32 %s1891, %s1892
        %s1894 = smul.addr %s1893, 4
        %s1895 = scalar_lea.vmem %s6, %s1894
      $region90: #{upblock_forward.1} parent=85 // pred_fallthru
        _
    $region86: #{upblock_forward.1} parent=5 // pred_fallthru
      _
  $region6: #{upblock_forward.1} parent=0 // loop_footer
    %s16 = sadd.s32 1, %s12
  $region7: #{upblock_forward.1} parent=0 // loop_footer_branch
    %11 = sbr.rel target = $region3
  $region8: #{upblock_forward.1} parent=0 // loop_exit
    _
  %1896 = vsyncmov [#allocation3]
  %s1897 = vpop.sfrf %1896
  %p1898 = scmp.eq.s32.totalorder %s1897, 0
  %p1899 = pneg %p1898
  %1901 = shalt.err (%p1899)

</llo_original>
